<compile_context>
chip_gen: v5e
topology: v5e:2x2
jax: 0.10.0
libtpu: 0.0.40
codegen_flags: <defaults>
</compile_context>

<pallas_src>
import functools
import math

import jax
import jax.numpy as jnp
from jax.experimental import pallas as pl
from jax.experimental.pallas import tpu as pltpu


# ---------------------------------------------------------------------------
# helpers
# ---------------------------------------------------------------------------
def _round_up(x, m):
    return ((x + m - 1) // m) * m


def _layer_norm_padded(x, gamma, beta, d_real, eps=1e-5):
    """LayerNorm over the real (un-padded) feature dim.

    `x` is (N, Dp) with lanes >= d_real exactly zero, so plain sums divided by
    d_real give the correct mean / E[x^2]; gamma/beta are zero in the padded
    lanes so padded outputs stay exactly zero.
    """
    mean = jnp.sum(x, axis=-1, keepdims=True) / d_real
    ex2 = jnp.sum(x * x, axis=-1, keepdims=True) / d_real
    var = ex2 - mean * mean
    return (x - mean) * jax.lax.rsqrt(var + eps) * gamma + beta


def _cross_attention(q_src_pe, kv_src_pe, kv_src,
                     wq, wk, wv, wo, bq, bk, bv, bo,
                     bb, s, dp, scale):
    """Single-head cross attention.  Inputs are bf16 (bb*s, dp) slabs."""
    # Projections on the flattened slab -> MXU sees bb*s rows per pass.
    q = jnp.dot(q_src_pe, wq, preferred_element_type=jnp.float32) + bq
    k = jnp.dot(kv_src_pe, wk, preferred_element_type=jnp.float32) + bk
    v = jnp.dot(kv_src, wv, preferred_element_type=jnp.float32) + bv

    q3 = q.reshape(bb, s, dp).astype(jnp.bfloat16)
    k3 = k.reshape(bb, s, dp).astype(jnp.bfloat16)
    v3 = v.reshape(bb, s, dp).astype(jnp.bfloat16)

    # Batched q @ k^T without materializing a transpose of k.
    scores = jnp.einsum('bqd,bkd->bqk', q3, k3,
                        preferred_element_type=jnp.float32) * scale
    scores = scores - jnp.max(scores, axis=-1, keepdims=True)
    p = jnp.exp(scores)                          # f32 exp (safe on all gens)
    l = jnp.sum(p, axis=-1, keepdims=True)

    ctx = jnp.einsum('bqk,bkd->bqd', p.astype(jnp.bfloat16), v3,
                     preferred_element_type=jnp.float32)
    # Fused softmax normalization: one (S, D) multiply via the EUP reciprocal.
    ctx = ctx * pl.reciprocal(l, approx=True)

    ctx = ctx.reshape(bb * s, dp).astype(jnp.bfloat16)
    return jnp.dot(ctx, wo, preferred_element_type=jnp.float32) + bo


# packed-vector row layout (all (1, Dp) rows in one f32 array)
_VEC_ROWS = ['bq_a', 'bk_a', 'bv_a', 'bo_a', 'ln_a_g', 'ln_a_b',
             'bq_b', 'bk_b', 'bv_b', 'bo_b', 'ln_b_g', 'ln_b_b',
             'lnf_g', 'lnf_b']
_N_VEC_ROWS = 16  # padded to a full sublane tile


# ---------------------------------------------------------------------------
# kernel
# ---------------------------------------------------------------------------
def cross_modal_encoder_kernel(a_ref, b_ref, pe_ref, vec_ref,
                               wqa_ref, wka_ref, wva_ref, woa_ref,
                               wqb_ref, wkb_ref, wvb_ref, wob_ref,
                               out_ref, *, d_real, fusion_scale):
    bb, s, dp = a_ref.shape
    scale = 1.0 / math.sqrt(d_real)

    a = a_ref[...]                      # (bb, s, dp) f32, padded lanes = 0
    b = b_ref[...]
    pe = pe_ref[...]                    # (s, dp) f32
    vec = vec_ref[...]                  # (16, dp) f32

    bq_a, bk_a, bv_a, bo_a = vec[0:1], vec[1:2], vec[2:3], vec[3:4]
    g_a, be_a = vec[4:5], vec[5:6]
    bq_b, bk_b, bv_b, bo_b = vec[6:7], vec[7:8], vec[8:9], vec[9:10]
    g_b, be_b = vec[10:11], vec[11:12]
    g_f, be_f = vec[12:13], vec[13:14]

    # TODO(synk): attention-internal dropout (p from enc_cfg) omitted — eval
    # semantics (identity).
    a_pe = (a + pe[None, :, :]).reshape(bb * s, dp)
    b_pe = (b + pe[None, :, :]).reshape(bb * s, dp)
    a_flat = a.reshape(bb * s, dp)
    b_flat = b.reshape(bb * s, dp)

    a_pe_bf = a_pe.astype(jnp.bfloat16)
    b_pe_bf = b_pe.astype(jnp.bfloat16)
    a_bf = a_flat.astype(jnp.bfloat16)
    b_bf = b_flat.astype(jnp.bfloat16)

    # TODO(synk): single-head attention over d_model; enc_cfg-driven nhead>1
    # head split (and the per-head 1/sqrt(d/nhead) scale) not implemented.
    # a attends to b  (q = a + pe, k = b + pe, v = b)
    at = _cross_attention(a_pe_bf, b_pe_bf, b_bf,
                          wqa_ref[...], wka_ref[...], wva_ref[...], woa_ref[...],
                          bq_a, bk_a, bv_a, bo_a, bb, s, dp, scale)
    # b attends to a  (q = b + pe, k = a + pe, v = a)
    bt = _cross_attention(b_pe_bf, a_pe_bf, a_bf,
                          wqb_ref[...], wka_ref[...], wvb_ref[...], wob_ref[...],
                          bq_b, bk_b, bv_b, bo_b, bb, s, dp, scale)

    a_new = _layer_norm_padded(a_flat + at, g_a, be_a, d_real)
    b_new = _layer_norm_padded(b_flat + bt, g_b, be_b, d_real)

    # fusion: 'sum' -> (a + b), 'mean' -> (a + b) / 2
    x = (a_new + b_new) * fusion_scale

    # final LayerNorm (self.norm)
    out = _layer_norm_padded(x, g_f, be_f, d_real)
    out_ref[...] = out.reshape(bb, s, dp).astype(out_ref.dtype)


# fix: the second cross-attention must use the *b-direction* key weights.
def cross_modal_encoder_kernel(a_ref, b_ref, pe_ref, vec_ref,          # noqa: F811
                               wqa_ref, wka_ref, wva_ref, woa_ref,
                               wqb_ref, wkb_ref, wvb_ref, wob_ref,
                               out_ref, *, d_real, fusion_scale):
    bb, s, dp = a_ref.shape
    scale = 1.0 / math.sqrt(d_real)

    a = a_ref[...]
    b = b_ref[...]
    pe = pe_ref[...]
    vec = vec_ref[...]

    bq_a, bk_a, bv_a, bo_a = vec[0:1], vec[1:2], vec[2:3], vec[3:4]
    g_a, be_a = vec[4:5], vec[5:6]
    bq_b, bk_b, bv_b, bo_b = vec[6:7], vec[7:8], vec[8:9], vec[9:10]
    g_b, be_b = vec[10:11], vec[11:12]
    g_f, be_f = vec[12:13], vec[13:14]

    a_pe = (a + pe[None, :, :]).reshape(bb * s, dp)
    b_pe = (b + pe[None, :, :]).reshape(bb * s, dp)
    a_flat = a.reshape(bb * s, dp)
    b_flat = b.reshape(bb * s, dp)

    a_pe_bf = a_pe.astype(jnp.bfloat16)
    b_pe_bf = b_pe.astype(jnp.bfloat16)
    a_bf = a_flat.astype(jnp.bfloat16)
    b_bf = b_flat.astype(jnp.bfloat16)

    at = _cross_attention(a_pe_bf, b_pe_bf, b_bf,
                          wqa_ref[...], wka_ref[...], wva_ref[...], woa_ref[...],
                          bq_a, bk_a, bv_a, bo_a, bb, s, dp, scale)
    bt = _cross_attention(b_pe_bf, a_pe_bf, a_bf,
                          wqb_ref[...], wkb_ref[...], wvb_ref[...], wob_ref[...],
                          bq_b, bk_b, bv_b, bo_b, bb, s, dp, scale)

    a_new = _layer_norm_padded(a_flat + at, g_a, be_a, d_real)
    b_new = _layer_norm_padded(b_flat + bt, g_b, be_b, d_real)

    x = (a_new + b_new) * fusion_scale
    out = _layer_norm_padded(x, g_f, be_f, d_real)
    out_ref[...] = out.reshape(bb, s, dp).astype(out_ref.dtype)


# ---------------------------------------------------------------------------
# wrapper
# ---------------------------------------------------------------------------
def _pick_block_b(B, S):
    """Pick batch block: aim for >=256 packed rows, but keep >=2 grid steps."""
    target_rows = 256
    bb = min(B, max(1, -(-target_rows // S)))
    while B % bb:
        bb -= 1
    if B // bb < 2 and B > 1:
        bb2 = max(1, B // 2)
        while B % bb2:
            bb2 -= 1
        bb = bb2
    return bb


def _pad_last(x, target):
    pad = target - x.shape[-1]
    if pad == 0:
        return x
    widths = [(0, 0)] * (x.ndim - 1) + [(0, pad)]
    return jnp.pad(x, widths)


def sinusoidal_pe(S, D):
    pos = jnp.arange(S, dtype=jnp.float32)[:, None]
    i = jnp.arange(0, D, 2, dtype=jnp.float32)
    div = jnp.exp(-math.log(10000.0) * i / D)
    pe = jnp.zeros((S, D), jnp.float32)
    pe = pe.at[:, 0::2].set(jnp.sin(pos * div))
    pe = pe.at[:, 1::2].set(jnp.cos(pos * div))
    return pe


def cross_modal_encoder(a, b, params, *, fusion_type='sum', block_b=None):
    assert fusion_type in ('sum', 'mean')
    # TODO(synk): fusion_type='concat' (torch.cat + mapping Linear(2D->D)) not
    # implemented in this kernel.
    B, S, D = a.shape
    assert b.shape == (B, S, D)
    dp = _round_up(max(D, 128), 128)            # lane-dense feature dim

    if block_b is None:
        block_b = _pick_block_b(B, S)
    assert B % block_b == 0, "block_b must divide batch"

    # ---- lane-dense, padded operands -------------------------------------
    a_p = _pad_last(a.astype(jnp.float32), dp)
    b_p = _pad_last(b.astype(jnp.float32), dp)
    pe_p = _pad_last(sinusoidal_pe(S, D), dp)

    w_names = ['wq_a', 'wk_a', 'wv_a', 'wo_a', 'wq_b', 'wk_b', 'wv_b', 'wo_b']
    ws = [jnp.pad(params[n].astype(jnp.float32),
                  ((0, dp - D), (0, dp - D))).astype(jnp.bfloat16)
          for n in w_names]

    vec = jnp.zeros((_N_VEC_ROWS, dp), jnp.float32)
    for i, n in enumerate(_VEC_ROWS):
        vec = vec.at[i, :D].set(params[n].astype(jnp.float32).reshape(-1))

    fusion_scale = 0.5 if fusion_type == 'mean' else 1.0

    # ---- specs ------------------------------------------------------------
    grid = (B // block_b,)
    in_specs = [
        pl.BlockSpec((block_b, S, dp), lambda i: (i, 0, 0)),   # a
        pl.BlockSpec((block_b, S, dp), lambda i: (i, 0, 0)),   # b
        pl.BlockSpec((S, dp), lambda i: (0, 0)),               # pe
        pl.BlockSpec((_N_VEC_ROWS, dp), lambda i: (0, 0)),     # packed vectors
    ] + [pl.BlockSpec((dp, dp), lambda i: (0, 0)) for _ in ws]
    out_spec = pl.BlockSpec((block_b, S, dp), lambda i: (i, 0, 0))

    # ---- VMEM budget: weights + double-buffered I/O blocks + temporaries --
    est = (len(ws) * dp * dp * 2                       # bf16 weights
           + _N_VEC_ROWS * dp * 4 + S * dp * 4         # vec + pe
           + 2 * 3 * block_b * S * dp * 4              # double-buffered a/b/out
           + 16 * block_b * S * dp * 4                 # activation temporaries
           + 4 * block_b * S * S * 4)                  # attention scores
    vmem_limit = int(min(max(4 * est, 32 << 20), 48 << 20))

    kernel = functools.partial(cross_modal_encoder_kernel,
                               d_real=D, fusion_scale=fusion_scale)

    out_padded = pl.pallas_call(
        kernel,
        grid=grid,
        in_specs=in_specs,
        out_specs=out_spec,
        out_shape=jax.ShapeDtypeStruct((B, S, dp), jnp.float32),
        compiler_params=pltpu.CompilerParams(
            dimension_semantics=("parallel",),
            vmem_limit_bytes=vmem_limit),
    )(a_p, b_p, pe_p, vec, *ws)

    return out_padded[..., :D]


# ---------------------------------------------------------------------------
# params / demo
# ---------------------------------------------------------------------------
def init_params(key, d_model):
    keys = jax.random.split(key, 8)

    def n(k, shape, fan):
        return jax.random.normal(k, shape, jnp.float32) / math.sqrt(fan)

    p = {}
    for i, side in enumerate(('a', 'b')):
        p[f'wq_{side}'] = n(keys[4 * i + 0], (d_model, d_model), d_model)
        p[f'wk_{side}'] = n(keys[4 * i + 1], (d_model, d_model), d_model)
        p[f'wv_{side}'] = n(keys[4 * i + 2], (d_model, d_model), d_model)
        p[f'wo_{side}'] = n(keys[4 * i + 3], (d_model, d_model), d_model)
        for bname in ('bq', 'bk', 'bv', 'bo'):
            p[f'{bname}_{side}'] = jnp.zeros((d_model,), jnp.float32)
        p[f'ln_{side}_g'] = jnp.ones((d_model,), jnp.float32)
        p[f'ln_{side}_b'] = jnp.zeros((d_model,), jnp.float32)
    p['lnf_g'] = jnp.ones((d_model,), jnp.float32)
    p['lnf_b'] = jnp.zeros((d_model,), jnp.float32)
    return p


if __name__ == "__main__":
    B, S, D = 4, 8, 32

    key = jax.random.PRNGKey(0)
    k_a, k_b, k_p = jax.random.split(key, 3)
    a = jax.random.normal(k_a, (B, S, D), jnp.float32)
    b = jax.random.normal(k_b, (B, S, D), jnp.float32)
    params = init_params(k_p, D)

    out = cross_modal_encoder(a, b, params, fusion_type='sum')
    out = jax.block_until_ready(out)

    assert out.shape == (B, S, D)
    assert bool(jnp.all(jnp.isfinite(out)))
    print("KERNEL_OK")
</pallas_src>

<mosaic_0001>
module attributes {stable_mosaic.version = 11 : i64} {
  func.func @cross_modal_encoder_kernel(%arg0: i32, %arg1: memref<2x8x128xf32, #tpu.memory_space<vmem>>, %arg2: memref<2x8x128xf32, #tpu.memory_space<vmem>>, %arg3: memref<8x128xf32, #tpu.memory_space<vmem>>, %arg4: memref<16x128xf32, #tpu.memory_space<vmem>>, %arg5: memref<128x128xbf16, #tpu.memory_space<vmem>>, %arg6: memref<128x128xbf16, #tpu.memory_space<vmem>>, %arg7: memref<128x128xbf16, #tpu.memory_space<vmem>>, %arg8: memref<128x128xbf16, #tpu.memory_space<vmem>>, %arg9: memref<128x128xbf16, #tpu.memory_space<vmem>>, %arg10: memref<128x128xbf16, #tpu.memory_space<vmem>>, %arg11: memref<128x128xbf16, #tpu.memory_space<vmem>>, %arg12: memref<128x128xbf16, #tpu.memory_space<vmem>>, %arg13: memref<2x8x128xf32, #tpu.memory_space<vmem>>) attributes {dimension_semantics = [#tpu.dimension_semantics<parallel>], iteration_bounds = array<i64: 2>, scalar_prefetch = 0 : i64, scratch_operands = 0 : i64, tpu.core_type = #tpu.core_type<tc>, window_params = [{transform_indices = @transform_0, window_bounds = array<i64: 2, 8, 128>}, {transform_indices = @transform_1, window_bounds = array<i64: 2, 8, 128>}, {pipeline_mode = #tpu.pipeline_mode<synchronous>, transform_indices = @transform_2, window_bounds = array<i64: 8, 128>}, {pipeline_mode = #tpu.pipeline_mode<synchronous>, transform_indices = @transform_3, window_bounds = array<i64: 16, 128>}, {pipeline_mode = #tpu.pipeline_mode<synchronous>, transform_indices = @transform_4, window_bounds = array<i64: 128, 128>}, {pipeline_mode = #tpu.pipeline_mode<synchronous>, transform_indices = @transform_5, window_bounds = array<i64: 128, 128>}, {pipeline_mode = #tpu.pipeline_mode<synchronous>, transform_indices = @transform_6, window_bounds = array<i64: 128, 128>}, {pipeline_mode = #tpu.pipeline_mode<synchronous>, transform_indices = @transform_7, window_bounds = array<i64: 128, 128>}, {pipeline_mode = #tpu.pipeline_mode<synchronous>, transform_indices = @transform_8, window_bounds = array<i64: 128, 128>}, {pipeline_mode = #tpu.pipeline_mode<synchronous>, transform_indices = @transform_9, window_bounds = array<i64: 128, 128>}, {pipeline_mode = #tpu.pipeline_mode<synchronous>, transform_indices = @transform_10, window_bounds = array<i64: 128, 128>}, {pipeline_mode = #tpu.pipeline_mode<synchronous>, transform_indices = @transform_11, window_bounds = array<i64: 128, 128>}, {transform_indices = @transform_12, window_bounds = array<i64: 2, 8, 128>}]} {
    %c0 = arith.constant 0 : index
    %c0_0 = arith.constant 0 : index
    %c0_1 = arith.constant 0 : index
    %0 = vector.load %arg1[%c0, %c0_0, %c0_1] : memref<2x8x128xf32, #tpu.memory_space<vmem>>, vector<2x8x128xf32>
    %c0_2 = arith.constant 0 : index
    %c0_3 = arith.constant 0 : index
    %c0_4 = arith.constant 0 : index
    %1 = vector.load %arg2[%c0_2, %c0_3, %c0_4] : memref<2x8x128xf32, #tpu.memory_space<vmem>>, vector<2x8x128xf32>
    %c0_5 = arith.constant 0 : index
    %c0_6 = arith.constant 0 : index
    %2 = vector.load %arg3[%c0_5, %c0_6] : memref<8x128xf32, #tpu.memory_space<vmem>>, vector<8x128xf32>
    %c0_7 = arith.constant 0 : index
    %c0_8 = arith.constant 0 : index
    %3 = vector.load %arg4[%c0_7, %c0_8] : memref<16x128xf32, #tpu.memory_space<vmem>>, vector<16x128xf32>
    %4 = vector.extract_strided_slice %3 {offsets = [0, 0], sizes = [1, 128], strides = [1, 1]} : vector<16x128xf32> to vector<1x128xf32>
    %5 = vector.extract_strided_slice %3 {offsets = [1, 0], sizes = [1, 128], strides = [1, 1]} : vector<16x128xf32> to vector<1x128xf32>
    %6 = vector.extract_strided_slice %3 {offsets = [2, 0], sizes = [1, 128], strides = [1, 1]} : vector<16x128xf32> to vector<1x128xf32>
    %7 = vector.extract_strided_slice %3 {offsets = [3, 0], sizes = [1, 128], strides = [1, 1]} : vector<16x128xf32> to vector<1x128xf32>
    %8 = vector.extract_strided_slice %3 {offsets = [4, 0], sizes = [1, 128], strides = [1, 1]} : vector<16x128xf32> to vector<1x128xf32>
    %9 = vector.extract_strided_slice %3 {offsets = [5, 0], sizes = [1, 128], strides = [1, 1]} : vector<16x128xf32> to vector<1x128xf32>
    %10 = vector.extract_strided_slice %3 {offsets = [6, 0], sizes = [1, 128], strides = [1, 1]} : vector<16x128xf32> to vector<1x128xf32>
    %11 = vector.extract_strided_slice %3 {offsets = [7, 0], sizes = [1, 128], strides = [1, 1]} : vector<16x128xf32> to vector<1x128xf32>
    %12 = vector.extract_strided_slice %3 {offsets = [8, 0], sizes = [1, 128], strides = [1, 1]} : vector<16x128xf32> to vector<1x128xf32>
    %13 = vector.extract_strided_slice %3 {offsets = [9, 0], sizes = [1, 128], strides = [1, 1]} : vector<16x128xf32> to vector<1x128xf32>
    %14 = vector.extract_strided_slice %3 {offsets = [10, 0], sizes = [1, 128], strides = [1, 1]} : vector<16x128xf32> to vector<1x128xf32>
    %15 = vector.extract_strided_slice %3 {offsets = [11, 0], sizes = [1, 128], strides = [1, 1]} : vector<16x128xf32> to vector<1x128xf32>
    %16 = vector.extract_strided_slice %3 {offsets = [12, 0], sizes = [1, 128], strides = [1, 1]} : vector<16x128xf32> to vector<1x128xf32>
    %17 = vector.extract_strided_slice %3 {offsets = [13, 0], sizes = [1, 128], strides = [1, 1]} : vector<16x128xf32> to vector<1x128xf32>
    %18 = vector.shape_cast %2 : vector<8x128xf32> to vector<1x8x128xf32>
    %19 = vector.broadcast %18 : vector<1x8x128xf32> to vector<2x8x128xf32>
    %20 = arith.addf %0, %19 : vector<2x8x128xf32>
    %21 = vector.shape_cast %20 : vector<2x8x128xf32> to vector<16x128xf32>
    %22 = vector.shape_cast %2 : vector<8x128xf32> to vector<1x8x128xf32>
    %23 = vector.broadcast %22 : vector<1x8x128xf32> to vector<2x8x128xf32>
    %24 = arith.addf %1, %23 : vector<2x8x128xf32>
    %25 = vector.shape_cast %24 : vector<2x8x128xf32> to vector<16x128xf32>
    %26 = vector.shape_cast %0 : vector<2x8x128xf32> to vector<16x128xf32>
    %27 = vector.shape_cast %1 : vector<2x8x128xf32> to vector<16x128xf32>
    %28 = arith.truncf %21 : vector<16x128xf32> to vector<16x128xbf16>
    %29 = arith.truncf %25 : vector<16x128xf32> to vector<16x128xbf16>
    %30 = arith.truncf %26 : vector<16x128xf32> to vector<16x128xbf16>
    %31 = arith.truncf %27 : vector<16x128xf32> to vector<16x128xbf16>
    %c0_9 = arith.constant 0 : index
    %c0_10 = arith.constant 0 : index
    %32 = vector.load %arg5[%c0_9, %c0_10] : memref<128x128xbf16, #tpu.memory_space<vmem>>, vector<128x128xbf16>
    %c0_11 = arith.constant 0 : index
    %c0_12 = arith.constant 0 : index
    %33 = vector.load %arg6[%c0_11, %c0_12] : memref<128x128xbf16, #tpu.memory_space<vmem>>, vector<128x128xbf16>
    %c0_13 = arith.constant 0 : index
    %c0_14 = arith.constant 0 : index
    %34 = vector.load %arg7[%c0_13, %c0_14] : memref<128x128xbf16, #tpu.memory_space<vmem>>, vector<128x128xbf16>
    %c0_15 = arith.constant 0 : index
    %c0_16 = arith.constant 0 : index
    %35 = vector.load %arg8[%c0_15, %c0_16] : memref<128x128xbf16, #tpu.memory_space<vmem>>, vector<128x128xbf16>
    %cst = arith.constant dense<0.000000e+00> : vector<16x128xf32>
    %36 = tpu.matmul %28, %32, %cst {dimension_numbers = #tpu.dot_dimension_numbers<[1], [0], [0], [1], [0, 0, 1, 1], [], []>} : vector<16x128xbf16>, vector<128x128xbf16>, vector<16x128xf32> -> vector<16x128xf32>
    %37 = vector.broadcast %4 : vector<1x128xf32> to vector<16x128xf32>
    %38 = arith.addf %36, %37 : vector<16x128xf32>
    %cst_17 = arith.constant dense<0.000000e+00> : vector<16x128xf32>
    %39 = tpu.matmul %29, %33, %cst_17 {dimension_numbers = #tpu.dot_dimension_numbers<[1], [0], [0], [1], [0, 0, 1, 1], [], []>} : vector<16x128xbf16>, vector<128x128xbf16>, vector<16x128xf32> -> vector<16x128xf32>
    %40 = vector.broadcast %5 : vector<1x128xf32> to vector<16x128xf32>
    %41 = arith.addf %39, %40 : vector<16x128xf32>
    %cst_18 = arith.constant dense<0.000000e+00> : vector<16x128xf32>
    %42 = tpu.matmul %31, %34, %cst_18 {dimension_numbers = #tpu.dot_dimension_numbers<[1], [0], [0], [1], [0, 0, 1, 1], [], []>} : vector<16x128xbf16>, vector<128x128xbf16>, vector<16x128xf32> -> vector<16x128xf32>
    %43 = vector.broadcast %6 : vector<1x128xf32> to vector<16x128xf32>
    %44 = arith.addf %42, %43 : vector<16x128xf32>
    %45 = vector.shape_cast %38 : vector<16x128xf32> to vector<2x8x128xf32>
    %46 = arith.truncf %45 : vector<2x8x128xf32> to vector<2x8x128xbf16>
    %47 = vector.shape_cast %41 : vector<16x128xf32> to vector<2x8x128xf32>
    %48 = arith.truncf %47 : vector<2x8x128xf32> to vector<2x8x128xbf16>
    %49 = vector.shape_cast %44 : vector<16x128xf32> to vector<2x8x128xf32>
    %50 = arith.truncf %49 : vector<2x8x128xf32> to vector<2x8x128xbf16>
    "tpu.trace_start"() <{level = 10 : i32, message = "bqd,bkd->bqk"}> : () -> ()
    %cst_19 = arith.constant dense<0.000000e+00> : vector<2x8x8xf32>
    %51 = tpu.matmul %46, %48, %cst_19 {dimension_numbers = #tpu.dot_dimension_numbers<[2], [2], [1], [1], [0, 0, 0, 1, 1, 1], [0], [0]>} : vector<2x8x128xbf16>, vector<2x8x128xbf16>, vector<2x8x8xf32> -> vector<2x8x8xf32>
    "tpu.trace_stop"() : () -> ()
    %cst_20 = arith.constant 0.176776692 : f32
    %52 = vector.broadcast %cst_20 : f32 to vector<2x8x8xf32>
    %53 = arith.mulf %51, %52 : vector<2x8x8xf32>
    %cst_21 = arith.constant dense<0xFF800000> : vector<2x8xf32>
    %54 = vector.multi_reduction <maximumf>, %53, %cst_21 [2] : vector<2x8x8xf32> to vector<2x8xf32>
    %55 = vector.shape_cast %54 : vector<2x8xf32> to vector<2x8x1xf32>
    %56 = vector.broadcast %55 : vector<2x8x1xf32> to vector<2x8x8xf32>
    %57 = arith.subf %53, %56 : vector<2x8x8xf32>
    %58 = math.exp %57 : vector<2x8x8xf32>
    %cst_22 = arith.constant dense<0.000000e+00> : vector<2x8xf32>
    %59 = vector.multi_reduction <add>, %58, %cst_22 [2] : vector<2x8x8xf32> to vector<2x8xf32>
    %60 = vector.shape_cast %59 : vector<2x8xf32> to vector<2x8x1xf32>
    %61 = arith.truncf %58 : vector<2x8x8xf32> to vector<2x8x8xbf16>
    "tpu.trace_start"() <{level = 10 : i32, message = "bqk,bkd->bqd"}> : () -> ()
    %cst_23 = arith.constant dense<0.000000e+00> : vector<2x8x128xf32>
    %62 = tpu.matmul %61, %50, %cst_23 {dimension_numbers = #tpu.dot_dimension_numbers<[2], [1], [1], [2], [0, 0, 0, 1, 1, 2], [0], [0]>} : vector<2x8x8xbf16>, vector<2x8x128xbf16>, vector<2x8x128xf32> -> vector<2x8x128xf32>
    "tpu.trace_stop"() : () -> ()
    %63 = tpu.reciprocal %60 {approx = true} : vector<2x8x1xf32> -> vector<2x8x1xf32>
    %64 = vector.broadcast %63 : vector<2x8x1xf32> to vector<2x8x128xf32>
    %65 = arith.mulf %62, %64 : vector<2x8x128xf32>
    %66 = vector.shape_cast %65 : vector<2x8x128xf32> to vector<16x128xf32>
    %67 = arith.truncf %66 : vector<16x128xf32> to vector<16x128xbf16>
    %cst_24 = arith.constant dense<0.000000e+00> : vector<16x128xf32>
    %68 = tpu.matmul %67, %35, %cst_24 {dimension_numbers = #tpu.dot_dimension_numbers<[1], [0], [0], [1], [0, 0, 1, 1], [], []>} : vector<16x128xbf16>, vector<128x128xbf16>, vector<16x128xf32> -> vector<16x128xf32>
    %69 = vector.broadcast %7 : vector<1x128xf32> to vector<16x128xf32>
    %70 = arith.addf %68, %69 : vector<16x128xf32>
    %c0_25 = arith.constant 0 : index
    %c0_26 = arith.constant 0 : index
    %71 = vector.load %arg9[%c0_25, %c0_26] : memref<128x128xbf16, #tpu.memory_space<vmem>>, vector<128x128xbf16>
    %c0_27 = arith.constant 0 : index
    %c0_28 = arith.constant 0 : index
    %72 = vector.load %arg10[%c0_27, %c0_28] : memref<128x128xbf16, #tpu.memory_space<vmem>>, vector<128x128xbf16>
    %c0_29 = arith.constant 0 : index
    %c0_30 = arith.constant 0 : index
    %73 = vector.load %arg11[%c0_29, %c0_30] : memref<128x128xbf16, #tpu.memory_space<vmem>>, vector<128x128xbf16>
    %c0_31 = arith.constant 0 : index
    %c0_32 = arith.constant 0 : index
    %74 = vector.load %arg12[%c0_31, %c0_32] : memref<128x128xbf16, #tpu.memory_space<vmem>>, vector<128x128xbf16>
    %cst_33 = arith.constant dense<0.000000e+00> : vector<16x128xf32>
    %75 = tpu.matmul %29, %71, %cst_33 {dimension_numbers = #tpu.dot_dimension_numbers<[1], [0], [0], [1], [0, 0, 1, 1], [], []>} : vector<16x128xbf16>, vector<128x128xbf16>, vector<16x128xf32> -> vector<16x128xf32>
    %76 = vector.broadcast %10 : vector<1x128xf32> to vector<16x128xf32>
    %77 = arith.addf %75, %76 : vector<16x128xf32>
    %cst_34 = arith.constant dense<0.000000e+00> : vector<16x128xf32>
    %78 = tpu.matmul %28, %72, %cst_34 {dimension_numbers = #tpu.dot_dimension_numbers<[1], [0], [0], [1], [0, 0, 1, 1], [], []>} : vector<16x128xbf16>, vector<128x128xbf16>, vector<16x128xf32> -> vector<16x128xf32>
    %79 = vector.broadcast %11 : vector<1x128xf32> to vector<16x128xf32>
    %80 = arith.addf %78, %79 : vector<16x128xf32>
    %cst_35 = arith.constant dense<0.000000e+00> : vector<16x128xf32>
    %81 = tpu.matmul %30, %73, %cst_35 {dimension_numbers = #tpu.dot_dimension_numbers<[1], [0], [0], [1], [0, 0, 1, 1], [], []>} : vector<16x128xbf16>, vector<128x128xbf16>, vector<16x128xf32> -> vector<16x128xf32>
    %82 = vector.broadcast %12 : vector<1x128xf32> to vector<16x128xf32>
    %83 = arith.addf %81, %82 : vector<16x128xf32>
    %84 = vector.shape_cast %77 : vector<16x128xf32> to vector<2x8x128xf32>
    %85 = arith.truncf %84 : vector<2x8x128xf32> to vector<2x8x128xbf16>
    %86 = vector.shape_cast %80 : vector<16x128xf32> to vector<2x8x128xf32>
    %87 = arith.truncf %86 : vector<2x8x128xf32> to vector<2x8x128xbf16>
    %88 = vector.shape_cast %83 : vector<16x128xf32> to vector<2x8x128xf32>
    %89 = arith.truncf %88 : vector<2x8x128xf32> to vector<2x8x128xbf16>
    "tpu.trace_start"() <{level = 10 : i32, message = "bqd,bkd->bqk"}> : () -> ()
    %cst_36 = arith.constant dense<0.000000e+00> : vector<2x8x8xf32>
    %90 = tpu.matmul %85, %87, %cst_36 {dimension_numbers = #tpu.dot_dimension_numbers<[2], [2], [1], [1], [0, 0, 0, 1, 1, 1], [0], [0]>} : vector<2x8x128xbf16>, vector<2x8x128xbf16>, vector<2x8x8xf32> -> vector<2x8x8xf32>
    "tpu.trace_stop"() : () -> ()
    %cst_37 = arith.constant 0.176776692 : f32
    %91 = vector.broadcast %cst_37 : f32 to vector<2x8x8xf32>
    %92 = arith.mulf %90, %91 : vector<2x8x8xf32>
    %cst_38 = arith.constant dense<0xFF800000> : vector<2x8xf32>
    %93 = vector.multi_reduction <maximumf>, %92, %cst_38 [2] : vector<2x8x8xf32> to vector<2x8xf32>
    %94 = vector.shape_cast %93 : vector<2x8xf32> to vector<2x8x1xf32>
    %95 = vector.broadcast %94 : vector<2x8x1xf32> to vector<2x8x8xf32>
    %96 = arith.subf %92, %95 : vector<2x8x8xf32>
    %97 = math.exp %96 : vector<2x8x8xf32>
    %cst_39 = arith.constant dense<0.000000e+00> : vector<2x8xf32>
    %98 = vector.multi_reduction <add>, %97, %cst_39 [2] : vector<2x8x8xf32> to vector<2x8xf32>
    %99 = vector.shape_cast %98 : vector<2x8xf32> to vector<2x8x1xf32>
    %100 = arith.truncf %97 : vector<2x8x8xf32> to vector<2x8x8xbf16>
    "tpu.trace_start"() <{level = 10 : i32, message = "bqk,bkd->bqd"}> : () -> ()
    %cst_40 = arith.constant dense<0.000000e+00> : vector<2x8x128xf32>
    %101 = tpu.matmul %100, %89, %cst_40 {dimension_numbers = #tpu.dot_dimension_numbers<[2], [1], [1], [2], [0, 0, 0, 1, 1, 2], [0], [0]>} : vector<2x8x8xbf16>, vector<2x8x128xbf16>, vector<2x8x128xf32> -> vector<2x8x128xf32>
    "tpu.trace_stop"() : () -> ()
    %102 = tpu.reciprocal %99 {approx = true} : vector<2x8x1xf32> -> vector<2x8x1xf32>
    %103 = vector.broadcast %102 : vector<2x8x1xf32> to vector<2x8x128xf32>
    %104 = arith.mulf %101, %103 : vector<2x8x128xf32>
    %105 = vector.shape_cast %104 : vector<2x8x128xf32> to vector<16x128xf32>
    %106 = arith.truncf %105 : vector<16x128xf32> to vector<16x128xbf16>
    %cst_41 = arith.constant dense<0.000000e+00> : vector<16x128xf32>
    %107 = tpu.matmul %106, %74, %cst_41 {dimension_numbers = #tpu.dot_dimension_numbers<[1], [0], [0], [1], [0, 0, 1, 1], [], []>} : vector<16x128xbf16>, vector<128x128xbf16>, vector<16x128xf32> -> vector<16x128xf32>
    %108 = vector.broadcast %13 : vector<1x128xf32> to vector<16x128xf32>
    %109 = arith.addf %107, %108 : vector<16x128xf32>
    %110 = arith.addf %26, %70 : vector<16x128xf32>
    %cst_42 = arith.constant dense<0.000000e+00> : vector<16xf32>
    %111 = vector.multi_reduction <add>, %110, %cst_42 [1] : vector<16x128xf32> to vector<16xf32>
    %112 = vector.shape_cast %111 : vector<16xf32> to vector<16x1xf32>
    %cst_43 = arith.constant 3.200000e+01 : f32
    %113 = vector.broadcast %cst_43 : f32 to vector<16x1xf32>
    %114 = arith.divf %112, %113 : vector<16x1xf32>
    %115 = arith.mulf %110, %110 : vector<16x128xf32>
    %cst_44 = arith.constant dense<0.000000e+00> : vector<16xf32>
    %116 = vector.multi_reduction <add>, %115, %cst_44 [1] : vector<16x128xf32> to vector<16xf32>
    %117 = vector.shape_cast %116 : vector<16xf32> to vector<16x1xf32>
    %cst_45 = arith.constant 3.200000e+01 : f32
    %118 = vector.broadcast %cst_45 : f32 to vector<16x1xf32>
    %119 = arith.divf %117, %118 : vector<16x1xf32>
    %120 = arith.mulf %114, %114 : vector<16x1xf32>
    %121 = arith.subf %119, %120 : vector<16x1xf32>
    %122 = vector.broadcast %114 : vector<16x1xf32> to vector<16x128xf32>
    %123 = arith.subf %110, %122 : vector<16x128xf32>
    %cst_46 = arith.constant 9.99999974E-6 : f32
    %124 = vector.broadcast %cst_46 : f32 to vector<16x1xf32>
    %125 = arith.addf %121, %124 : vector<16x1xf32>
    %126 = math.rsqrt %125 : vector<16x1xf32>
    %127 = vector.broadcast %126 : vector<16x1xf32> to vector<16x128xf32>
    %128 = arith.mulf %123, %127 : vector<16x128xf32>
    %129 = vector.broadcast %8 : vector<1x128xf32> to vector<16x128xf32>
    %130 = arith.mulf %128, %129 : vector<16x128xf32>
    %131 = vector.broadcast %9 : vector<1x128xf32> to vector<16x128xf32>
    %132 = arith.addf %130, %131 : vector<16x128xf32>
    %133 = arith.addf %27, %109 : vector<16x128xf32>
    %cst_47 = arith.constant dense<0.000000e+00> : vector<16xf32>
    %134 = vector.multi_reduction <add>, %133, %cst_47 [1] : vector<16x128xf32> to vector<16xf32>
    %135 = vector.shape_cast %134 : vector<16xf32> to vector<16x1xf32>
    %cst_48 = arith.constant 3.200000e+01 : f32
    %136 = vector.broadcast %cst_48 : f32 to vector<16x1xf32>
    %137 = arith.divf %135, %136 : vector<16x1xf32>
    %138 = arith.mulf %133, %133 : vector<16x128xf32>
    %cst_49 = arith.constant dense<0.000000e+00> : vector<16xf32>
    %139 = vector.multi_reduction <add>, %138, %cst_49 [1] : vector<16x128xf32> to vector<16xf32>
    %140 = vector.shape_cast %139 : vector<16xf32> to vector<16x1xf32>
    %cst_50 = arith.constant 3.200000e+01 : f32
    %141 = vector.broadcast %cst_50 : f32 to vector<16x1xf32>
    %142 = arith.divf %140, %141 : vector<16x1xf32>
    %143 = arith.mulf %137, %137 : vector<16x1xf32>
    %144 = arith.subf %142, %143 : vector<16x1xf32>
    %145 = vector.broadcast %137 : vector<16x1xf32> to vector<16x128xf32>
    %146 = arith.subf %133, %145 : vector<16x128xf32>
    %cst_51 = arith.constant 9.99999974E-6 : f32
    %147 = vector.broadcast %cst_51 : f32 to vector<16x1xf32>
    %148 = arith.addf %144, %147 : vector<16x1xf32>
    %149 = math.rsqrt %148 : vector<16x1xf32>
    %150 = vector.broadcast %149 : vector<16x1xf32> to vector<16x128xf32>
    %151 = arith.mulf %146, %150 : vector<16x128xf32>
    %152 = vector.broadcast %14 : vector<1x128xf32> to vector<16x128xf32>
    %153 = arith.mulf %151, %152 : vector<16x128xf32>
    %154 = vector.broadcast %15 : vector<1x128xf32> to vector<16x128xf32>
    %155 = arith.addf %153, %154 : vector<16x128xf32>
    %156 = arith.addf %132, %155 : vector<16x128xf32>
    %cst_52 = arith.constant 1.000000e+00 : f32
    %157 = vector.broadcast %cst_52 : f32 to vector<16x128xf32>
    %158 = arith.mulf %156, %157 : vector<16x128xf32>
    %cst_53 = arith.constant dense<0.000000e+00> : vector<16xf32>
    %159 = vector.multi_reduction <add>, %158, %cst_53 [1] : vector<16x128xf32> to vector<16xf32>
    %160 = vector.shape_cast %159 : vector<16xf32> to vector<16x1xf32>
    %cst_54 = arith.constant 3.200000e+01 : f32
    %161 = vector.broadcast %cst_54 : f32 to vector<16x1xf32>
    %162 = arith.divf %160, %161 : vector<16x1xf32>
    %163 = arith.mulf %158, %158 : vector<16x128xf32>
    %cst_55 = arith.constant dense<0.000000e+00> : vector<16xf32>
    %164 = vector.multi_reduction <add>, %163, %cst_55 [1] : vector<16x128xf32> to vector<16xf32>
    %165 = vector.shape_cast %164 : vector<16xf32> to vector<16x1xf32>
    %cst_56 = arith.constant 3.200000e+01 : f32
    %166 = vector.broadcast %cst_56 : f32 to vector<16x1xf32>
    %167 = arith.divf %165, %166 : vector<16x1xf32>
    %168 = arith.mulf %162, %162 : vector<16x1xf32>
    %169 = arith.subf %167, %168 : vector<16x1xf32>
    %170 = vector.broadcast %162 : vector<16x1xf32> to vector<16x128xf32>
    %171 = arith.subf %158, %170 : vector<16x128xf32>
    %cst_57 = arith.constant 9.99999974E-6 : f32
    %172 = vector.broadcast %cst_57 : f32 to vector<16x1xf32>
    %173 = arith.addf %169, %172 : vector<16x1xf32>
    %174 = math.rsqrt %173 : vector<16x1xf32>
    %175 = vector.broadcast %174 : vector<16x1xf32> to vector<16x128xf32>
    %176 = arith.mulf %171, %175 : vector<16x128xf32>
    %177 = vector.broadcast %16 : vector<1x128xf32> to vector<16x128xf32>
    %178 = arith.mulf %176, %177 : vector<16x128xf32>
    %179 = vector.broadcast %17 : vector<1x128xf32> to vector<16x128xf32>
    %180 = arith.addf %178, %179 : vector<16x128xf32>
    %181 = vector.shape_cast %180 : vector<16x128xf32> to vector<2x8x128xf32>
    %c0_58 = arith.constant 0 : index
    %c0_59 = arith.constant 0 : index
    %c0_60 = arith.constant 0 : index
    %182 = vector.load %arg13[%c0_58, %c0_59, %c0_60] : memref<2x8x128xf32, #tpu.memory_space<vmem>>, vector<2x8x128xf32>
    tpu.vector_store %arg13[%c0_58, %c0_59, %c0_60], %181 {strides = array<i32>} : memref<2x8x128xf32, #tpu.memory_space<vmem>>, vector<2x8x128xf32>,
    return
  }
  func.func @transform_0(%arg0: i32) -> (i32, i32, i32) {
    %c0_i32 = arith.constant 0 : i32
    %c0_i32_0 = arith.constant 0 : i32
    %c0_i32_1 = arith.constant 0 : i32
    return %arg0, %c0_i32, %c0_i32_0 : i32, i32, i32
  }
  func.func @transform_1(%arg0: i32) -> (i32, i32, i32) {
    %c0_i32 = arith.constant 0 : i32
    %c0_i32_0 = arith.constant 0 : i32
    %c0_i32_1 = arith.constant 0 : i32
    return %arg0, %c0_i32, %c0_i32_0 : i32, i32, i32
  }
  func.func @transform_2(%arg0: i32) -> (i32, i32) {
    %c0_i32 = arith.constant 0 : i32
    %c0_i32_0 = arith.constant 0 : i32
    %c0_i32_1 = arith.constant 0 : i32
    return %c0_i32, %c0_i32_0 : i32, i32
  }
  func.func @transform_3(%arg0: i32) -> (i32, i32) {
    %c0_i32 = arith.constant 0 : i32
    %c0_i32_0 = arith.constant 0 : i32
    %c0_i32_1 = arith.constant 0 : i32
    return %c0_i32, %c0_i32_0 : i32, i32
  }
  func.func @transform_4(%arg0: i32) -> (i32, i32) {
    %c0_i32 = arith.constant 0 : i32
    %c0_i32_0 = arith.constant 0 : i32
    %c0_i32_1 = arith.constant 0 : i32
    return %c0_i32, %c0_i32_0 : i32, i32
  }
  func.func @transform_5(%arg0: i32) -> (i32, i32) {
    %c0_i32 = arith.constant 0 : i32
    %c0_i32_0 = arith.constant 0 : i32
    %c0_i32_1 = arith.constant 0 : i32
    return %c0_i32, %c0_i32_0 : i32, i32
  }
  func.func @transform_6(%arg0: i32) -> (i32, i32) {
    %c0_i32 = arith.constant 0 : i32
    %c0_i32_0 = arith.constant 0 : i32
    %c0_i32_1 = arith.constant 0 : i32
    return %c0_i32, %c0_i32_0 : i32, i32
  }
  func.func @transform_7(%arg0: i32) -> (i32, i32) {
    %c0_i32 = arith.constant 0 : i32
    %c0_i32_0 = arith.constant 0 : i32
    %c0_i32_1 = arith.constant 0 : i32
    return %c0_i32, %c0_i32_0 : i32, i32
  }
  func.func @transform_8(%arg0: i32) -> (i32, i32) {
    %c0_i32 = arith.constant 0 : i32
    %c0_i32_0 = arith.constant 0 : i32
    %c0_i32_1 = arith.constant 0 : i32
    return %c0_i32, %c0_i32_0 : i32, i32
  }
  func.func @transform_9(%arg0: i32) -> (i32, i32) {
    %c0_i32 = arith.constant 0 : i32
    %c0_i32_0 = arith.constant 0 : i32
    %c0_i32_1 = arith.constant 0 : i32
    return %c0_i32, %c0_i32_0 : i32, i32
  }
  func.func @transform_10(%arg0: i32) -> (i32, i32) {
    %c0_i32 = arith.constant 0 : i32
    %c0_i32_0 = arith.constant 0 : i32
    %c0_i32_1 = arith.constant 0 : i32
    return %c0_i32, %c0_i32_0 : i32, i32
  }
  func.func @transform_11(%arg0: i32) -> (i32, i32) {
    %c0_i32 = arith.constant 0 : i32
    %c0_i32_0 = arith.constant 0 : i32
    %c0_i32_1 = arith.constant 0 : i32
    return %c0_i32, %c0_i32_0 : i32, i32
  }
  func.func @transform_12(%arg0: i32) -> (i32, i32, i32) {
    %c0_i32 = arith.constant 0 : i32
    %c0_i32_0 = arith.constant 0 : i32
    %c0_i32_1 = arith.constant 0 : i32
    return %arg0, %c0_i32, %c0_i32_0 : i32, i32, i32
  }
}

</mosaic_0001>

<llo_original>
// kernel: tpu_custom_call.1
$region0: #{tpu_custom_call.1}
  #allocation0 [shape = 'u32[]', space=smem, size = 0x4, offset = 0x4, fixed_abs, tag = 'smem constant byte address 0x4 - core index']
  #allocation1 [shape = 'u32[72,128]{1,0:T(1,128)}', space=vmem, size = 0x9000, scoped, tag = 'internal scratch']
  %s0 = inlined_call_operand.hbm [shape: f32[4,8,128], index: 0, kind: input, shape index: {}]
  %s1 = inlined_call_operand.hbm [shape: f32[4,8,128], index: 1, kind: input, shape index: {}]
  %s2 = inlined_call_operand.hbm [shape: f32[8,128], index: 2, kind: input, shape index: {}]
  %s3 = inlined_call_operand.hbm [shape: f32[16,128], index: 3, kind: input, shape index: {}]
  %s4 = inlined_call_operand.hbm [shape: bf16[128,128], index: 4, kind: input, shape index: {}]
  %s5 = inlined_call_operand.hbm [shape: bf16[128,128], index: 5, kind: input, shape index: {}]
  %s6 = inlined_call_operand.hbm [shape: bf16[128,128], index: 6, kind: input, shape index: {}]
  %s7 = inlined_call_operand.hbm [shape: bf16[128,128], index: 7, kind: input, shape index: {}]
  %s8 = inlined_call_operand.hbm [shape: bf16[128,128], index: 8, kind: input, shape index: {}]
  %s9 = inlined_call_operand.hbm [shape: bf16[128,128], index: 9, kind: input, shape index: {}]
  %s10 = inlined_call_operand.hbm [shape: bf16[128,128], index: 10, kind: input, shape index: {}]
  %s11 = inlined_call_operand.hbm [shape: bf16[128,128], index: 11, kind: input, shape index: {}]
  %s12 = inlined_call_operand.hbm [shape: f32[4,8,128], index: 12, kind: output, shape index: {}]
  %s13 = sld [smem:[#allocation0]]
  $region129: #{tpu_custom_call.1} parent=0
    _
  %s15 = ssub.s32 1, %s13
  %s16 = scalar_select 0, %s15, %s13
  $region1: #{tpu_custom_call.1} parent=0
    #allocation2 [shape = 'u8[16384]{0}', space=vmem, size = 0x4000, scoped, tag = 'input window, operand 0']
    #allocation3 [shape = 's32[2]{0}', space=sflag, size = 0x8, scoped, tag = 'scoped memory for tpu_custom_call.1']
    #allocation4 [shape = 's32[2]{0}', space=sflag, size = 0x8, scoped, tag = 'scoped memory for tpu_custom_call.1']
    #allocation5 [shape = 'u8[16384]{0}', space=vmem, size = 0x4000, scoped, tag = 'input window, operand 1']
    #allocation6 [shape = 's32[2]{0}', space=sflag, size = 0x8, scoped, tag = 'scoped memory for tpu_custom_call.1']
    #allocation7 [shape = 'u8[4096]{0}', space=vmem, size = 0x1000, scoped, tag = 'input window, operand 2, single buffered']
    #allocation8 [shape = 'u8[8192]{0}', space=vmem, size = 0x2000, scoped, tag = 'input window, operand 3, single buffered']
    #allocation9 [shape = 's32[1]{0}', space=sflag, size = 0x4, scoped, tag = 'scoped memory for tpu_custom_call.1']
    #allocation10 [shape = 'u8[32768]{0}', space=vmem, size = 0x8000, scoped, tag = 'input window, operand 4, single buffered']
    #allocation11 [shape = 'u8[32768]{0}', space=vmem, size = 0x8000, scoped, tag = 'input window, operand 5, single buffered']
    #allocation12 [shape = 's32[1]{0}', space=sflag, size = 0x4, scoped, tag = 'scoped memory for tpu_custom_call.1']
    #allocation13 [shape = 'u8[32768]{0}', space=vmem, size = 0x8000, scoped, tag = 'input window, operand 6, single buffered']
    #allocation14 [shape = 'u8[32768]{0}', space=vmem, size = 0x8000, scoped, tag = 'input window, operand 7, single buffered']
    #allocation15 [shape = 's32[1]{0}', space=sflag, size = 0x4, scoped, tag = 'scoped memory for tpu_custom_call.1']
    #allocation16 [shape = 'u8[32768]{0}', space=vmem, size = 0x8000, scoped, tag = 'input window, operand 8, single buffered']
    #allocation17 [shape = 'u8[32768]{0}', space=vmem, size = 0x8000, scoped, tag = 'input window, operand 9, single buffered']
    #allocation18 [shape = 's32[1]{0}', space=sflag, size = 0x4, scoped, tag = 'scoped memory for tpu_custom_call.1']
    #allocation19 [shape = 'u8[32768]{0}', space=vmem, size = 0x8000, scoped, tag = 'input window, operand 10, single buffered']
    #allocation20 [shape = 'u8[32768]{0}', space=vmem, size = 0x8000, scoped, tag = 'input window, operand 11, single buffered']
    #allocation21 [shape = 's32[1]{0}', space=sflag, size = 0x4, scoped, tag = 'scoped memory for tpu_custom_call.1']
    #allocation22 [shape = 'u8[16384]{0}', space=vmem, size = 0x4000, scoped, tag = 'output window, operand 0']
    %17 = vsyncpa [#allocation3], 0
    %s18 = scalar_lea.sflag [#allocation3], 1
    %19 = vsyncpa %s18, 0
    %20 = vsyncpa [#allocation6], 0
    %s21 = scalar_lea.sflag [#allocation6], 1
    %22 = vsyncpa %s21, 0
    %23 = vsyncpa [#allocation9], 0
    %24 = vsyncpa [#allocation12], 0
    %25 = vsyncpa [#allocation15], 0
    %26 = vsyncpa [#allocation18], 0
    %27 = vsyncpa [#allocation21], 0
    %28 = vsyncpa [#allocation4], 0
    %s29 = scalar_lea.sflag [#allocation4], 1
    %30 = vsyncpa %s29, 0
    loop: start=0, step=1, limit=4
    $region2: #{tpu_custom_call.1} parent=1 // loop_pre_header
      _
    $region3: #{tpu_custom_call.1} parent=1 // loop_header
      %s32 = sphi 0, %s36
      %p33 = scmp.ge.s32.totalorder %s32, 4
      %s42 = sphi 0, %s44
      %s45 = sphi 0, %s42
      %s46 = sphi 0, %s45
      %s62 = sphi 0, %s46
      %s68 = sphi 0, %s70
      %s71 = sphi 0, %s68
      %s72 = sphi 0, %s71
      %s88 = sphi 0, %s72
      %s92 = sphi 0, %s92
      %s94 = sphi 0, %s92
      %s95 = sphi 0, %s94
      %s109 = sphi 0, %s95
      %s113 = sphi 0, %s113
      %s115 = sphi 0, %s113
      %s116 = sphi 0, %s115
      %s130 = sphi 0, %s116
      %s134 = sphi 0, %s134
      %s136 = sphi 0, %s134
      %s137 = sphi 0, %s136
      %s151 = sphi 0, %s137
      %s155 = sphi 0, %s155
      %s157 = sphi 0, %s155
      %s158 = sphi 0, %s157
      %s172 = sphi 0, %s158
      %s176 = sphi 0, %s176
      %s178 = sphi 0, %s176
      %s179 = sphi 0, %s178
      %s193 = sphi 0, %s179
      %s197 = sphi 0, %s197
      %s199 = sphi 0, %s197
      %s200 = sphi 0, %s199
      %s214 = sphi 0, %s200
      %s218 = sphi 0, %s218
      %s220 = sphi 0, %s218
      %s221 = sphi 0, %s220
      %s235 = sphi 0, %s221
      %s239 = sphi 0, %s239
      %s241 = sphi 0, %s239
      %s242 = sphi 0, %s241
      %s256 = sphi 0, %s242
      %s260 = sphi 0, %s260
      %s262 = sphi 0, %s260
      %s263 = sphi 0, %s262
      %s277 = sphi 0, %s263
      %s281 = sphi 0, %s281
      %s283 = sphi 0, %s281
      %s284 = sphi 0, %s283
      %s298 = sphi 0, %s284
      %s304 = sphi 0, %s306
      %s307 = sphi 0, %s304
      %s308 = sphi 0, %s307
      %s324 = sphi 0, %s308
    $region4: #{tpu_custom_call.1} parent=1 // loop_header_branch
      %35 = sbr.rel (%p33) target = $region8
    $region5: #{tpu_custom_call.1} parent=1 // loop_body
      %s37 = ssub.s32 %s32, 1
      %s38 = ssub.s32 %s32, 2
      %s39 = sadd.s32 %s32, 1
      %s40 = ssub.s32 %s32, %s39
      %p41 = scmp.eq.s32.totalorder %s40, 0
      %s43 = sadd.s32 %s42, 1
      %s44 = scalar_select %p41, %s42, %s43
      %p47 = pneg %p41
      %p48 = scmp.eq.s32.totalorder %s32, 1
      %p49 = por %p47, %p48
      %p50 = scmp.ne.s32.totalorder %s42, %s45
      %p51 = scmp.eq.s32.totalorder %s32, 0
      %p52 = por %p50, %p51
      %p53 = scmp.ne.s32.totalorder %s42, %s45
      %p54 = scmp.eq.s32.totalorder %s37, 1
      %p55 = por %p53, %p54
      %p56 = scmp.ne.s32.totalorder %s45, %s46
      %p57 = scmp.eq.s32.totalorder %s37, 0
      %p58 = por %p56, %p57
      %p59 = scmp.ne.s32.totalorder %s45, %s46
      %p60 = scmp.eq.s32.totalorder %s38, 1
      %p61 = por %p59, %p60
      %p63 = scmp.ne.s32.totalorder %s46, %s62
      %p64 = scmp.eq.s32.totalorder %s38, 0
      %p65 = por %p63, %p64
      %s66 = ssub.s32 %s32, %s39
      %p67 = scmp.eq.s32.totalorder %s66, 0
      %s69 = sadd.s32 %s68, 1
      %s70 = scalar_select %p67, %s68, %s69
      %p73 = pneg %p67
      %p74 = scmp.eq.s32.totalorder %s32, 1
      %p75 = por %p73, %p74
      %p76 = scmp.ne.s32.totalorder %s68, %s71
      %p77 = scmp.eq.s32.totalorder %s32, 0
      %p78 = por %p76, %p77
      %p79 = scmp.ne.s32.totalorder %s68, %s71
      %p80 = scmp.eq.s32.totalorder %s37, 1
      %p81 = por %p79, %p80
      %p82 = scmp.ne.s32.totalorder %s71, %s72
      %p83 = scmp.eq.s32.totalorder %s37, 0
      %p84 = por %p82, %p83
      %p85 = scmp.ne.s32.totalorder %s71, %s72
      %p86 = scmp.eq.s32.totalorder %s38, 1
      %p87 = por %p85, %p86
      %p89 = scmp.ne.s32.totalorder %s72, %s88
      %p90 = scmp.eq.s32.totalorder %s38, 0
      %p91 = por %p89, %p90
      %s93 = sadd.s32 %s92, 1
      %p96 = scmp.eq.s32.totalorder %s32, 1
      %p97 = scmp.ne.s32.totalorder %s92, %s94
      %p98 = scmp.eq.s32.totalorder %s32, 0
      %p99 = por %p97, %p98
      %p100 = scmp.ne.s32.totalorder %s92, %s94
      %p101 = scmp.eq.s32.totalorder %s37, 1
      %p102 = por %p100, %p101
      %p103 = scmp.ne.s32.totalorder %s94, %s95
      %p104 = scmp.eq.s32.totalorder %s37, 0
      %p105 = por %p103, %p104
      %p106 = scmp.ne.s32.totalorder %s94, %s95
      %p107 = scmp.eq.s32.totalorder %s38, 1
      %p108 = por %p106, %p107
      %p110 = scmp.ne.s32.totalorder %s95, %s109
      %p111 = scmp.eq.s32.totalorder %s38, 0
      %p112 = por %p110, %p111
      %s114 = sadd.s32 %s113, 1
      %p117 = scmp.eq.s32.totalorder %s32, 1
      %p118 = scmp.ne.s32.totalorder %s113, %s115
      %p119 = scmp.eq.s32.totalorder %s32, 0
      %p120 = por %p118, %p119
      %p121 = scmp.ne.s32.totalorder %s113, %s115
      %p122 = scmp.eq.s32.totalorder %s37, 1
      %p123 = por %p121, %p122
      %p124 = scmp.ne.s32.totalorder %s115, %s116
      %p125 = scmp.eq.s32.totalorder %s37, 0
      %p126 = por %p124, %p125
      %p127 = scmp.ne.s32.totalorder %s115, %s116
      %p128 = scmp.eq.s32.totalorder %s38, 1
      %p129 = por %p127, %p128
      %p131 = scmp.ne.s32.totalorder %s116, %s130
      %p132 = scmp.eq.s32.totalorder %s38, 0
      %p133 = por %p131, %p132
      %s135 = sadd.s32 %s134, 1
      %p138 = scmp.eq.s32.totalorder %s32, 1
      %p139 = scmp.ne.s32.totalorder %s134, %s136
      %p140 = scmp.eq.s32.totalorder %s32, 0
      %p141 = por %p139, %p140
      %p142 = scmp.ne.s32.totalorder %s134, %s136
      %p143 = scmp.eq.s32.totalorder %s37, 1
      %p144 = por %p142, %p143
      %p145 = scmp.ne.s32.totalorder %s136, %s137
      %p146 = scmp.eq.s32.totalorder %s37, 0
      %p147 = por %p145, %p146
      %p148 = scmp.ne.s32.totalorder %s136, %s137
      %p149 = scmp.eq.s32.totalorder %s38, 1
      %p150 = por %p148, %p149
      %p152 = scmp.ne.s32.totalorder %s137, %s151
      %p153 = scmp.eq.s32.totalorder %s38, 0
      %p154 = por %p152, %p153
      %s156 = sadd.s32 %s155, 1
      %p159 = scmp.eq.s32.totalorder %s32, 1
      %p160 = scmp.ne.s32.totalorder %s155, %s157
      %p161 = scmp.eq.s32.totalorder %s32, 0
      %p162 = por %p160, %p161
      %p163 = scmp.ne.s32.totalorder %s155, %s157
      %p164 = scmp.eq.s32.totalorder %s37, 1
      %p165 = por %p163, %p164
      %p166 = scmp.ne.s32.totalorder %s157, %s158
      %p167 = scmp.eq.s32.totalorder %s37, 0
      %p168 = por %p166, %p167
      %p169 = scmp.ne.s32.totalorder %s157, %s158
      %p170 = scmp.eq.s32.totalorder %s38, 1
      %p171 = por %p169, %p170
      %p173 = scmp.ne.s32.totalorder %s158, %s172
      %p174 = scmp.eq.s32.totalorder %s38, 0
      %p175 = por %p173, %p174
      %s177 = sadd.s32 %s176, 1
      %p180 = scmp.eq.s32.totalorder %s32, 1
      %p181 = scmp.ne.s32.totalorder %s176, %s178
      %p182 = scmp.eq.s32.totalorder %s32, 0
      %p183 = por %p181, %p182
      %p184 = scmp.ne.s32.totalorder %s176, %s178
      %p185 = scmp.eq.s32.totalorder %s37, 1
      %p186 = por %p184, %p185
      %p187 = scmp.ne.s32.totalorder %s178, %s179
      %p188 = scmp.eq.s32.totalorder %s37, 0
      %p189 = por %p187, %p188
      %p190 = scmp.ne.s32.totalorder %s178, %s179
      %p191 = scmp.eq.s32.totalorder %s38, 1
      %p192 = por %p190, %p191
      %p194 = scmp.ne.s32.totalorder %s179, %s193
      %p195 = scmp.eq.s32.totalorder %s38, 0
      %p196 = por %p194, %p195
      %s198 = sadd.s32 %s197, 1
      %p201 = scmp.eq.s32.totalorder %s32, 1
      %p202 = scmp.ne.s32.totalorder %s197, %s199
      %p203 = scmp.eq.s32.totalorder %s32, 0
      %p204 = por %p202, %p203
      %p205 = scmp.ne.s32.totalorder %s197, %s199
      %p206 = scmp.eq.s32.totalorder %s37, 1
      %p207 = por %p205, %p206
      %p208 = scmp.ne.s32.totalorder %s199, %s200
      %p209 = scmp.eq.s32.totalorder %s37, 0
      %p210 = por %p208, %p209
      %p211 = scmp.ne.s32.totalorder %s199, %s200
      %p212 = scmp.eq.s32.totalorder %s38, 1
      %p213 = por %p211, %p212
      %p215 = scmp.ne.s32.totalorder %s200, %s214
      %p216 = scmp.eq.s32.totalorder %s38, 0
      %p217 = por %p215, %p216
      %s219 = sadd.s32 %s218, 1
      %p222 = scmp.eq.s32.totalorder %s32, 1
      %p223 = scmp.ne.s32.totalorder %s218, %s220
      %p224 = scmp.eq.s32.totalorder %s32, 0
      %p225 = por %p223, %p224
      %p226 = scmp.ne.s32.totalorder %s218, %s220
      %p227 = scmp.eq.s32.totalorder %s37, 1
      %p228 = por %p226, %p227
      %p229 = scmp.ne.s32.totalorder %s220, %s221
      %p230 = scmp.eq.s32.totalorder %s37, 0
      %p231 = por %p229, %p230
      %p232 = scmp.ne.s32.totalorder %s220, %s221
      %p233 = scmp.eq.s32.totalorder %s38, 1
      %p234 = por %p232, %p233
      %p236 = scmp.ne.s32.totalorder %s221, %s235
      %p237 = scmp.eq.s32.totalorder %s38, 0
      %p238 = por %p236, %p237
      %s240 = sadd.s32 %s239, 1
      %p243 = scmp.eq.s32.totalorder %s32, 1
      %p244 = scmp.ne.s32.totalorder %s239, %s241
      %p245 = scmp.eq.s32.totalorder %s32, 0
      %p246 = por %p244, %p245
      %p247 = scmp.ne.s32.totalorder %s239, %s241
      %p248 = scmp.eq.s32.totalorder %s37, 1
      %p249 = por %p247, %p248
      %p250 = scmp.ne.s32.totalorder %s241, %s242
      %p251 = scmp.eq.s32.totalorder %s37, 0
      %p252 = por %p250, %p251
      %p253 = scmp.ne.s32.totalorder %s241, %s242
      %p254 = scmp.eq.s32.totalorder %s38, 1
      %p255 = por %p253, %p254
      %p257 = scmp.ne.s32.totalorder %s242, %s256
      %p258 = scmp.eq.s32.totalorder %s38, 0
      %p259 = por %p257, %p258
      %s261 = sadd.s32 %s260, 1
      %p264 = scmp.eq.s32.totalorder %s32, 1
      %p265 = scmp.ne.s32.totalorder %s260, %s262
      %p266 = scmp.eq.s32.totalorder %s32, 0
      %p267 = por %p265, %p266
      %p268 = scmp.ne.s32.totalorder %s260, %s262
      %p269 = scmp.eq.s32.totalorder %s37, 1
      %p270 = por %p268, %p269
      %p271 = scmp.ne.s32.totalorder %s262, %s263
      %p272 = scmp.eq.s32.totalorder %s37, 0
      %p273 = por %p271, %p272
      %p274 = scmp.ne.s32.totalorder %s262, %s263
      %p275 = scmp.eq.s32.totalorder %s38, 1
      %p276 = por %p274, %p275
      %p278 = scmp.ne.s32.totalorder %s263, %s277
      %p279 = scmp.eq.s32.totalorder %s38, 0
      %p280 = por %p278, %p279
      %s282 = sadd.s32 %s281, 1
      %p285 = scmp.eq.s32.totalorder %s32, 1
      %p286 = scmp.ne.s32.totalorder %s281, %s283
      %p287 = scmp.eq.s32.totalorder %s32, 0
      %p288 = por %p286, %p287
      %p289 = scmp.ne.s32.totalorder %s281, %s283
      %p290 = scmp.eq.s32.totalorder %s37, 1
      %p291 = por %p289, %p290
      %p292 = scmp.ne.s32.totalorder %s283, %s284
      %p293 = scmp.eq.s32.totalorder %s37, 0
      %p294 = por %p292, %p293
      %p295 = scmp.ne.s32.totalorder %s283, %s284
      %p296 = scmp.eq.s32.totalorder %s38, 1
      %p297 = por %p295, %p296
      %p299 = scmp.ne.s32.totalorder %s284, %s298
      %p300 = scmp.eq.s32.totalorder %s38, 0
      %p301 = por %p299, %p300
      %s302 = ssub.s32 %s32, %s39
      %p303 = scmp.eq.s32.totalorder %s302, 0
      %s305 = sadd.s32 %s304, 1
      %s306 = scalar_select %p303, %s304, %s305
      %p309 = pneg %p303
      %p310 = scmp.eq.s32.totalorder %s32, 1
      %p311 = por %p309, %p310
      %p312 = scmp.ne.s32.totalorder %s304, %s307
      %p313 = scmp.eq.s32.totalorder %s32, 0
      %p314 = por %p312, %p313
      %p315 = scmp.ne.s32.totalorder %s304, %s307
      %p316 = scmp.eq.s32.totalorder %s37, 1
      %p317 = por %p315, %p316
      %p318 = scmp.ne.s32.totalorder %s307, %s308
      %p319 = scmp.eq.s32.totalorder %s37, 0
      %p320 = por %p318, %p319
      %p321 = scmp.ne.s32.totalorder %s307, %s308
      %p322 = scmp.eq.s32.totalorder %s38, 1
      %p323 = por %p321, %p322
      %p325 = scmp.ne.s32.totalorder %s308, %s324
      %p326 = scmp.eq.s32.totalorder %s38, 0
      %p327 = por %p325, %p326
      %p328 = scmp.le.s32.totalorder 1, %s32
      %p329 = scmp.lt.s32.totalorder %s32, 3
      %p330 = pnand %p328, %p329
      %p331 = pneg %p330
      // Predicated region
      $region9: #{tpu_custom_call.1} parent=5 // pred_check
        _
      $region10: #{tpu_custom_call.1} parent=5 // pred_check_branch
        %333 = sbr.rel (%p330) target = $region12
      $region11: #{tpu_custom_call.1} parent=5 // pred_region
        %s334 = ssub.s32 %s32, 1
        // Predicated region
        $region13: #{tpu_custom_call.1} parent=11 // pred_check
          %p335 = pneg %p105
        $region14: #{tpu_custom_call.1} parent=11 // pred_check_branch
          %337 = sbr.rel (%p335) target = $region16
        $region15: #{tpu_custom_call.1} parent=11 // pred_region
          %339 = vsyncadd [#allocation6], 0
          %s341 = sshll.u32 %s2, 4
          %s342 = int_to_ptr.hbm [resolvable:$true] %s341
          %s343 = sshll.u32 [#allocation7], 4
          %s344 = int_to_ptr.vmem [resolvable:$true] %s343
          %346 = dma.hbm_to_vmem [thread:$0]  %s342, 128, %s344, [#allocation6]
        $region16: #{tpu_custom_call.1} parent=11 // pred_fallthru
          _
        // Predicated region
        $region17: #{tpu_custom_call.1} parent=11 // pred_check
          %p347 = pneg %p126
        $region18: #{tpu_custom_call.1} parent=11 // pred_check_branch
          %349 = sbr.rel (%p347) target = $region20
        $region19: #{tpu_custom_call.1} parent=11 // pred_region
          %351 = vsyncadd [#allocation9], 0
          %s352 = sshll.u32 %s3, 4
          %s353 = int_to_ptr.hbm [resolvable:$true] %s352
          %s354 = sshll.u32 [#allocation8], 4
          %s355 = int_to_ptr.vmem [resolvable:$true] %s354
          %360 = dma.hbm_to_vmem [thread:$0]  %s353, 256, %s355, [#allocation9], 128, 128, 8
        $region20: #{tpu_custom_call.1} parent=11 // pred_fallthru
          _
        // Predicated region
        $region21: #{tpu_custom_call.1} parent=11 // pred_check
          %p361 = pneg %p147
        $region22: #{tpu_custom_call.1} parent=11 // pred_check_branch
          %363 = sbr.rel (%p361) target = $region24
        $region23: #{tpu_custom_call.1} parent=11 // pred_region
          %365 = vsyncadd [#allocation9], 0
          %s366 = sshll.u32 %s4, 4
          %s367 = int_to_ptr.hbm [resolvable:$true] %s366
          %s368 = sshll.u32 [#allocation10], 4
          %s369 = int_to_ptr.vmem [resolvable:$true] %s368
          %374 = dma.hbm_to_vmem [thread:$0]  %s367, 1024, %s369, [#allocation9], 64, 64, 4
        $region24: #{tpu_custom_call.1} parent=11 // pred_fallthru
          _
        // Predicated region
        $region25: #{tpu_custom_call.1} parent=11 // pred_check
          %p375 = pneg %p168
        $region26: #{tpu_custom_call.1} parent=11 // pred_check_branch
          %377 = sbr.rel (%p375) target = $region28
        $region27: #{tpu_custom_call.1} parent=11 // pred_region
          %379 = vsyncadd [#allocation12], 0
          %s380 = sshll.u32 %s5, 4
          %s381 = int_to_ptr.hbm [resolvable:$true] %s380
          %s382 = sshll.u32 [#allocation11], 4
          %s383 = int_to_ptr.vmem [resolvable:$true] %s382
          %388 = dma.hbm_to_vmem [thread:$0]  %s381, 1024, %s383, [#allocation12], 64, 64, 4
        $region28: #{tpu_custom_call.1} parent=11 // pred_fallthru
          _
        // Predicated region
        $region29: #{tpu_custom_call.1} parent=11 // pred_check
          %p389 = pneg %p189
        $region30: #{tpu_custom_call.1} parent=11 // pred_check_branch
          %391 = sbr.rel (%p389) target = $region32
        $region31: #{tpu_custom_call.1} parent=11 // pred_region
          %393 = vsyncadd [#allocation12], 0
          %s394 = sshll.u32 %s6, 4
          %s395 = int_to_ptr.hbm [resolvable:$true] %s394
          %s396 = sshll.u32 [#allocation13], 4
          %s397 = int_to_ptr.vmem [resolvable:$true] %s396
          %402 = dma.hbm_to_vmem [thread:$0]  %s395, 1024, %s397, [#allocation12], 64, 64, 4
        $region32: #{tpu_custom_call.1} parent=11 // pred_fallthru
          _
        // Predicated region
        $region33: #{tpu_custom_call.1} parent=11 // pred_check
          %p403 = pneg %p210
        $region34: #{tpu_custom_call.1} parent=11 // pred_check_branch
          %405 = sbr.rel (%p403) target = $region36
        $region35: #{tpu_custom_call.1} parent=11 // pred_region
          %407 = vsyncadd [#allocation15], 0
          %s408 = sshll.u32 %s7, 4
          %s409 = int_to_ptr.hbm [resolvable:$true] %s408
          %s410 = sshll.u32 [#allocation14], 4
          %s411 = int_to_ptr.vmem [resolvable:$true] %s410
          %416 = dma.hbm_to_vmem [thread:$0]  %s409, 1024, %s411, [#allocation15], 64, 64, 4
        $region36: #{tpu_custom_call.1} parent=11 // pred_fallthru
          _
        // Predicated region
        $region37: #{tpu_custom_call.1} parent=11 // pred_check
          %p417 = pneg %p231
        $region38: #{tpu_custom_call.1} parent=11 // pred_check_branch
          %419 = sbr.rel (%p417) target = $region40
        $region39: #{tpu_custom_call.1} parent=11 // pred_region
          %421 = vsyncadd [#allocation15], 0
          %s422 = sshll.u32 %s8, 4
          %s423 = int_to_ptr.hbm [resolvable:$true] %s422
          %s424 = sshll.u32 [#allocation16], 4
          %s425 = int_to_ptr.vmem [resolvable:$true] %s424
          %430 = dma.hbm_to_vmem [thread:$0]  %s423, 1024, %s425, [#allocation15], 64, 64, 4
        $region40: #{tpu_custom_call.1} parent=11 // pred_fallthru
          _
        // Predicated region
        $region41: #{tpu_custom_call.1} parent=11 // pred_check
          %p431 = pneg %p252
        $region42: #{tpu_custom_call.1} parent=11 // pred_check_branch
          %433 = sbr.rel (%p431) target = $region44
        $region43: #{tpu_custom_call.1} parent=11 // pred_region
          %435 = vsyncadd [#allocation18], 0
          %s436 = sshll.u32 %s9, 4
          %s437 = int_to_ptr.hbm [resolvable:$true] %s436
          %s438 = sshll.u32 [#allocation17], 4
          %s439 = int_to_ptr.vmem [resolvable:$true] %s438
          %444 = dma.hbm_to_vmem [thread:$0]  %s437, 1024, %s439, [#allocation18], 64, 64, 4
        $region44: #{tpu_custom_call.1} parent=11 // pred_fallthru
          _
        // Predicated region
        $region45: #{tpu_custom_call.1} parent=11 // pred_check
          %p445 = pneg %p273
        $region46: #{tpu_custom_call.1} parent=11 // pred_check_branch
          %447 = sbr.rel (%p445) target = $region48
        $region47: #{tpu_custom_call.1} parent=11 // pred_region
          %449 = vsyncadd [#allocation18], 0
          %s450 = sshll.u32 %s10, 4
          %s451 = int_to_ptr.hbm [resolvable:$true] %s450
          %s452 = sshll.u32 [#allocation19], 4
          %s453 = int_to_ptr.vmem [resolvable:$true] %s452
          %458 = dma.hbm_to_vmem [thread:$0]  %s451, 1024, %s453, [#allocation18], 64, 64, 4
        $region48: #{tpu_custom_call.1} parent=11 // pred_fallthru
          _
        // Predicated region
        $region49: #{tpu_custom_call.1} parent=11 // pred_check
          %p459 = pneg %p294
        $region50: #{tpu_custom_call.1} parent=11 // pred_check_branch
          %461 = sbr.rel (%p459) target = $region52
        $region51: #{tpu_custom_call.1} parent=11 // pred_region
          %463 = vsyncadd [#allocation21], 0
          %s464 = sshll.u32 %s11, 4
          %s465 = int_to_ptr.hbm [resolvable:$true] %s464
          %s466 = sshll.u32 [#allocation20], 4
          %s467 = int_to_ptr.vmem [resolvable:$true] %s466
          %472 = dma.hbm_to_vmem [thread:$0]  %s465, 1024, %s467, [#allocation21], 64, 64, 4
        $region52: #{tpu_custom_call.1} parent=11 // pred_fallthru
          _
      $region12: #{tpu_custom_call.1} parent=5 // pred_fallthru
        _
      %p473 = scmp.lt.s32.totalorder %s32, 2
      // Predicated region
      $region53: #{tpu_custom_call.1} parent=5 // pred_check
        %p474 = pneg %p473
      $region54: #{tpu_custom_call.1} parent=5 // pred_check_branch
        %476 = sbr.rel (%p474) target = $region56
      $region55: #{tpu_custom_call.1} parent=5 // pred_region
        // Predicated region
        $region57: #{tpu_custom_call.1} parent=55 // pred_check
          %p477 = pneg %p52
        $region58: #{tpu_custom_call.1} parent=55 // pred_check_branch
          %479 = sbr.rel (%p477) target = $region60
        $region59: #{tpu_custom_call.1} parent=55 // pred_region
          %s480 = sand.u32 %s42, 1
          %s481 = scalar_lea.sflag [#allocation3], %s480
          %s482 = sand.u32 %s42, 1
          %s483 = smul.addr %s482, 16
          %s484 = scalar_lea.vmem [#allocation2], %s483
          %s485 = smul.u32 2, %s32
          %487 = vsyncadd %s481, 0
          %s488 = smul.addr %s485, 8
          %s489 = scalar_lea.hbm %s0, %s488
          %s490 = sshll.u32 %s489, 4
          %s491 = int_to_ptr.hbm [resolvable:$true] %s490
          %s492 = sshll.u32 %s484, 4
          %s493 = int_to_ptr.vmem [resolvable:$true] %s492
          %498 = dma.hbm_to_vmem [thread:$0]  %s491, 256, %s493, %s481, 128, 128, 8
        $region60: #{tpu_custom_call.1} parent=55 // pred_fallthru
          _
        // Predicated region
        $region61: #{tpu_custom_call.1} parent=55 // pred_check
          %p499 = pneg %p78
        $region62: #{tpu_custom_call.1} parent=55 // pred_check_branch
          %501 = sbr.rel (%p499) target = $region64
        $region63: #{tpu_custom_call.1} parent=55 // pred_region
          %s502 = sand.u32 %s32, 1
          %s503 = scalar_lea.sflag [#allocation6], %s502
          %s504 = sand.u32 %s68, 1
          %s505 = smul.addr %s504, 16
          %s506 = scalar_lea.vmem [#allocation5], %s505
          %s507 = smul.u32 2, %s32
          %509 = vsyncadd %s503, 0
          %s510 = smul.addr %s507, 8
          %s511 = scalar_lea.hbm %s1, %s510
          %s512 = sshll.u32 %s511, 4
          %s513 = int_to_ptr.hbm [resolvable:$true] %s512
          %s514 = sshll.u32 %s506, 4
          %s515 = int_to_ptr.vmem [resolvable:$true] %s514
          %520 = dma.hbm_to_vmem [thread:$0]  %s513, 256, %s515, %s503, 128, 128, 8
        $region64: #{tpu_custom_call.1} parent=55 // pred_fallthru
          _
      $region56: #{tpu_custom_call.1} parent=5 // pred_fallthru
        _
      %p521 = scmp.le.s32.totalorder 1, %s32
      %p522 = scmp.lt.s32.totalorder %s32, 3
      %p523 = pnand %p521, %p522
      %p524 = pneg %p523
      // Predicated region
      $region65: #{tpu_custom_call.1} parent=5 // pred_check
        _
      $region66: #{tpu_custom_call.1} parent=5 // pred_check_branch
        %526 = sbr.rel (%p523) target = $region68
      $region67: #{tpu_custom_call.1} parent=5 // pred_region
        %s527 = ssub.s32 %s32, 1
        %s528 = sand.u32 %s45, 1
        %s529 = scalar_lea.sflag [#allocation3], %s528
        %s530 = sand.u32 %s45, 1
        %s531 = smul.addr %s530, 16
        %s532 = scalar_lea.vmem [#allocation2], %s531
        // Predicated region
        $region69: #{tpu_custom_call.1} parent=67 // pred_check
          %p533 = pneg %p58
        $region70: #{tpu_custom_call.1} parent=67 // pred_check_branch
          %535 = sbr.rel (%p533) target = $region72
        $region71: #{tpu_custom_call.1} parent=67 // pred_region
          %537 = dma.done %s529, 256
        $region72: #{tpu_custom_call.1} parent=67 // pred_fallthru
          _
        %s538 = sand.u32 %s37, 1
        %s539 = scalar_lea.sflag [#allocation6], %s538
        %s540 = sand.u32 %s71, 1
        %s541 = smul.addr %s540, 16
        %s542 = scalar_lea.vmem [#allocation5], %s541
        // Predicated region
        $region73: #{tpu_custom_call.1} parent=67 // pred_check
          %p543 = pneg %p84
        $region74: #{tpu_custom_call.1} parent=67 // pred_check_branch
          %545 = sbr.rel (%p543) target = $region76
        $region75: #{tpu_custom_call.1} parent=67 // pred_region
          %547 = dma.done %s539, 256
        $region76: #{tpu_custom_call.1} parent=67 // pred_fallthru
          _
        // Predicated region
        $region77: #{tpu_custom_call.1} parent=67 // pred_check
          %p548 = pneg %p105
        $region78: #{tpu_custom_call.1} parent=67 // pred_check_branch
          %550 = sbr.rel (%p548) target = $region80
        $region79: #{tpu_custom_call.1} parent=67 // pred_region
          %552 = dma.done [#allocation6], 128
        $region80: #{tpu_custom_call.1} parent=67 // pred_fallthru
          _
        // Predicated region
        $region81: #{tpu_custom_call.1} parent=67 // pred_check
          %p553 = pneg %p126
        $region82: #{tpu_custom_call.1} parent=67 // pred_check_branch
          %555 = sbr.rel (%p553) target = $region84
        $region83: #{tpu_custom_call.1} parent=67 // pred_region
          %557 = dma.done [#allocation9], 256
        $region84: #{tpu_custom_call.1} parent=67 // pred_fallthru
          _
        // Predicated region
        $region85: #{tpu_custom_call.1} parent=67 // pred_check
          %p558 = pneg %p147
        $region86: #{tpu_custom_call.1} parent=67 // pred_check_branch
          %560 = sbr.rel (%p558) target = $region88
        $region87: #{tpu_custom_call.1} parent=67 // pred_region
          %562 = dma.done [#allocation9], 1024
        $region88: #{tpu_custom_call.1} parent=67 // pred_fallthru
          _
        // Predicated region
        $region89: #{tpu_custom_call.1} parent=67 // pred_check
          %p563 = pneg %p168
        $region90: #{tpu_custom_call.1} parent=67 // pred_check_branch
          %565 = sbr.rel (%p563) target = $region92
        $region91: #{tpu_custom_call.1} parent=67 // pred_region
          %567 = dma.done [#allocation12], 1024
        $region92: #{tpu_custom_call.1} parent=67 // pred_fallthru
          _
        // Predicated region
        $region93: #{tpu_custom_call.1} parent=67 // pred_check
          %p568 = pneg %p189
        $region94: #{tpu_custom_call.1} parent=67 // pred_check_branch
          %570 = sbr.rel (%p568) target = $region96
        $region95: #{tpu_custom_call.1} parent=67 // pred_region
          %572 = dma.done [#allocation12], 1024
        $region96: #{tpu_custom_call.1} parent=67 // pred_fallthru
          _
        // Predicated region
        $region97: #{tpu_custom_call.1} parent=67 // pred_check
          %p573 = pneg %p210
        $region98: #{tpu_custom_call.1} parent=67 // pred_check_branch
          %575 = sbr.rel (%p573) target = $region100
        $region99: #{tpu_custom_call.1} parent=67 // pred_region
          %577 = dma.done [#allocation15], 1024
        $region100: #{tpu_custom_call.1} parent=67 // pred_fallthru
          _
        // Predicated region
        $region101: #{tpu_custom_call.1} parent=67 // pred_check
          %p578 = pneg %p231
        $region102: #{tpu_custom_call.1} parent=67 // pred_check_branch
          %580 = sbr.rel (%p578) target = $region104
        $region103: #{tpu_custom_call.1} parent=67 // pred_region
          %582 = dma.done [#allocation15], 1024
        $region104: #{tpu_custom_call.1} parent=67 // pred_fallthru
          _
        // Predicated region
        $region105: #{tpu_custom_call.1} parent=67 // pred_check
          %p583 = pneg %p252
        $region106: #{tpu_custom_call.1} parent=67 // pred_check_branch
          %585 = sbr.rel (%p583) target = $region108
        $region107: #{tpu_custom_call.1} parent=67 // pred_region
          %587 = dma.done [#allocation18], 1024
        $region108: #{tpu_custom_call.1} parent=67 // pred_fallthru
          _
        // Predicated region
        $region109: #{tpu_custom_call.1} parent=67 // pred_check
          %p588 = pneg %p273
        $region110: #{tpu_custom_call.1} parent=67 // pred_check_branch
          %590 = sbr.rel (%p588) target = $region112
        $region111: #{tpu_custom_call.1} parent=67 // pred_region
          %592 = dma.done [#allocation18], 1024
        $region112: #{tpu_custom_call.1} parent=67 // pred_fallthru
          _
        // Predicated region
        $region113: #{tpu_custom_call.1} parent=67 // pred_check
          %p593 = pneg %p294
        $region114: #{tpu_custom_call.1} parent=67 // pred_check_branch
          %595 = sbr.rel (%p593) target = $region116
        $region115: #{tpu_custom_call.1} parent=67 // pred_region
          %597 = dma.done [#allocation21], 1024
        $region116: #{tpu_custom_call.1} parent=67 // pred_fallthru
          _
        %s598 = sand.u32 %s45, 1
        %s599 = scalar_lea.sflag [#allocation3], %s598
        %s600 = sand.u32 %s45, 1
        %s601 = smul.addr %s600, 16
        %s602 = scalar_lea.vmem [#allocation2], %s601
        %p603 = pneg %p58
        %p604 = pneg %p55
        %s605 = sand.u32 %s37, 1
        %s606 = scalar_lea.sflag [#allocation6], %s605
        %s607 = sand.u32 %s71, 1
        %s608 = smul.addr %s607, 16
        %s609 = scalar_lea.vmem [#allocation5], %s608
        %p610 = pneg %p84
        %p611 = pneg %p81
        %p612 = pneg %p105
        %p613 = pneg %p102
        %p614 = pneg %p126
        %p615 = pneg %p123
        %p616 = pneg %p147
        %p617 = pneg %p144
        %p618 = pneg %p168
        %p619 = pneg %p165
        %p620 = pneg %p189
        %p621 = pneg %p186
        %p622 = pneg %p210
        %p623 = pneg %p207
        %p624 = pneg %p231
        %p625 = pneg %p228
        %p626 = pneg %p252
        %p627 = pneg %p249
        %p628 = pneg %p273
        %p629 = pneg %p270
        %p630 = pneg %p294
        %p631 = pneg %p291
        %p632 = pneg %p320
        %p633 = pneg %p317
        %s634 = sand.u32 %s307, 1
        %s635 = scalar_lea.sflag [#allocation4], %s634
        %s636 = sand.u32 %s307, 1
        %s637 = smul.addr %s636, 16
        %s638 = scalar_lea.vmem [#allocation22], %s637
        %s639 = smul.u32 2, %s37
        %s640 = smul.u32 2, %s37
        %s641 = smul.u32 2, %s37
        %v643 = vld [vmem:[%s532] sm:$0xff]
        %v644 = vld [vmem:[%s532 + $0x8] sm:$0xff]
        %v645 = vld [vmem:[%s542] sm:$0xff]
        %v646 = vld [vmem:[%s542 + $0x8] sm:$0xff]
        %v647 = vld [vmem:[#allocation7] sm:$0xff]
        %v648 = vld [vmem:[#allocation8] sm:$0xff]
        %v649 = vld [vmem:[#allocation8 + $0x8] sm:$0xff]
        %v650 = vadd.f32 %v643, %v647
        %v651 = vadd.f32 %v644, %v647
        %v652 = vadd.f32 %v645, %v647
        %v653 = vadd.f32 %v646, %v647
        %v654 = vpack.c.bf16 %v651, %v650
        %v655 = vpack.c.bf16 %v653, %v652
        %v656 = vpack.c.bf16 %v644, %v643
        %v657 = vpack.c.bf16 %v646, %v645
        %v658 = vld [vmem:[#allocation10] sm:$0xf]
        %v659 = vld [vmem:[#allocation10 + $0x4] sm:$0xf]
        %v660 = vld [vmem:[#allocation10 + $0x8] sm:$0xf]
        %v661 = vld [vmem:[#allocation10 + $0xc] sm:$0xf]
        %v662 = vld [vmem:[#allocation10 + $0x10] sm:$0xf]
        %v663 = vld [vmem:[#allocation10 + $0x14] sm:$0xf]
        %v664 = vld [vmem:[#allocation10 + $0x18] sm:$0xf]
        %v665 = vld [vmem:[#allocation10 + $0x1c] sm:$0xf]
        %v666 = vld [vmem:[#allocation10 + $0x20] sm:$0xf]
        %v667 = vld [vmem:[#allocation10 + $0x24] sm:$0xf]
        %v668 = vld [vmem:[#allocation10 + $0x28] sm:$0xf]
        %v669 = vld [vmem:[#allocation10 + $0x2c] sm:$0xf]
        %v670 = vld [vmem:[#allocation10 + $0x30] sm:$0xf]
        %v671 = vld [vmem:[#allocation10 + $0x34] sm:$0xf]
        %v672 = vld [vmem:[#allocation10 + $0x38] sm:$0xf]
        %v673 = vld [vmem:[#allocation10 + $0x3c] sm:$0xf]
        %v674 = vld [vmem:[#allocation11] sm:$0xf]
        %v675 = vld [vmem:[#allocation11 + $0x4] sm:$0xf]
        %v676 = vld [vmem:[#allocation11 + $0x8] sm:$0xf]
        %v677 = vld [vmem:[#allocation11 + $0xc] sm:$0xf]
        %v678 = vld [vmem:[#allocation11 + $0x10] sm:$0xf]
        %v679 = vld [vmem:[#allocation11 + $0x14] sm:$0xf]
        %v680 = vld [vmem:[#allocation11 + $0x18] sm:$0xf]
        %v681 = vld [vmem:[#allocation11 + $0x1c] sm:$0xf]
        %v682 = vld [vmem:[#allocation11 + $0x20] sm:$0xf]
        %v683 = vld [vmem:[#allocation11 + $0x24] sm:$0xf]
        %v684 = vld [vmem:[#allocation11 + $0x28] sm:$0xf]
        %v685 = vld [vmem:[#allocation11 + $0x2c] sm:$0xf]
        %v686 = vld [vmem:[#allocation11 + $0x30] sm:$0xf]
        %v687 = vld [vmem:[#allocation11 + $0x34] sm:$0xf]
        %v688 = vld [vmem:[#allocation11 + $0x38] sm:$0xf]
        %v689 = vld [vmem:[#allocation11 + $0x3c] sm:$0xf]
        %v690 = vld [vmem:[#allocation13] sm:$0xf]
        %v691 = vld [vmem:[#allocation13 + $0x4] sm:$0xf]
        %v692 = vld [vmem:[#allocation13 + $0x8] sm:$0xf]
        %v693 = vld [vmem:[#allocation13 + $0xc] sm:$0xf]
        %v694 = vld [vmem:[#allocation13 + $0x10] sm:$0xf]
        %v695 = vld [vmem:[#allocation13 + $0x14] sm:$0xf]
        %v696 = vld [vmem:[#allocation13 + $0x18] sm:$0xf]
        %v697 = vld [vmem:[#allocation13 + $0x1c] sm:$0xf]
        %v698 = vld [vmem:[#allocation13 + $0x20] sm:$0xf]
        %v699 = vld [vmem:[#allocation13 + $0x24] sm:$0xf]
        %v700 = vld [vmem:[#allocation13 + $0x28] sm:$0xf]
        %v701 = vld [vmem:[#allocation13 + $0x2c] sm:$0xf]
        %v702 = vld [vmem:[#allocation13 + $0x30] sm:$0xf]
        %v703 = vld [vmem:[#allocation13 + $0x34] sm:$0xf]
        %v704 = vld [vmem:[#allocation13 + $0x38] sm:$0xf]
        %v705 = vld [vmem:[#allocation13 + $0x3c] sm:$0xf]
        %v706 = vld [vmem:[#allocation14] sm:$0xf]
        %v707 = vld [vmem:[#allocation14 + $0x4] sm:$0xf]
        %v708 = vld [vmem:[#allocation14 + $0x8] sm:$0xf]
        %v709 = vld [vmem:[#allocation14 + $0xc] sm:$0xf]
        %v710 = vld [vmem:[#allocation14 + $0x10] sm:$0xf]
        %v711 = vld [vmem:[#allocation14 + $0x14] sm:$0xf]
        %v712 = vld [vmem:[#allocation14 + $0x18] sm:$0xf]
        %v713 = vld [vmem:[#allocation14 + $0x1c] sm:$0xf]
        %v714 = vld [vmem:[#allocation14 + $0x20] sm:$0xf]
        %v715 = vld [vmem:[#allocation14 + $0x24] sm:$0xf]
        %v716 = vld [vmem:[#allocation14 + $0x28] sm:$0xf]
        %v717 = vld [vmem:[#allocation14 + $0x2c] sm:$0xf]
        %v718 = vld [vmem:[#allocation14 + $0x30] sm:$0xf]
        %v719 = vld [vmem:[#allocation14 + $0x34] sm:$0xf]
        %v720 = vld [vmem:[#allocation14 + $0x38] sm:$0xf]
        %v721 = vld [vmem:[#allocation14 + $0x3c] sm:$0xf]
        %v722 = vperm.slane %v648, 0
        %v739 = vunpack.c.l.b16 %v658
        %v740 = vunpack.c.l.b16 %v659
        %v741 = vunpack.c.l.b16 %v660
        %v742 = vunpack.c.l.b16 %v661
        %v743 = vunpack.c.l.b16 %v662
        %v744 = vunpack.c.l.b16 %v663
        %v745 = vunpack.c.l.b16 %v664
        %v746 = vunpack.c.l.b16 %v665
        %v747 = vunpack.c.l.b16 %v666
        %v748 = vunpack.c.l.b16 %v667
        %v749 = vunpack.c.l.b16 %v668
        %v750 = vunpack.c.l.b16 %v669
        %v751 = vunpack.c.l.b16 %v670
        %v752 = vunpack.c.l.b16 %v671
        %v753 = vunpack.c.l.b16 %v672
        %v754 = vunpack.c.l.b16 %v673
        %v755 = vpack.c.b16 %v740, %v739
        %v756 = vpack.c.b16 %v742, %v741
        %v757 = vpack.c.b16 %v744, %v743
        %v758 = vpack.c.b16 %v746, %v745
        %v759 = vpack.c.b16 %v748, %v747
        %v760 = vpack.c.b16 %v750, %v749
        %v761 = vpack.c.b16 %v752, %v751
        %v762 = vpack.c.b16 %v754, %v753
        %771 = vmatpush.bf16.msra.mxu0 %v762
        %772 = vmatpush.bf16.msra.mxu0 %v761
        %773 = vmatpush.bf16.msra.mxu0 %v760
        %774 = vmatpush.bf16.msra.mxu0 %v759
        %775 = vmatpush.bf16.msra.mxu0 %v758
        %776 = vmatpush.bf16.msra.mxu0 %v757
        %777 = vmatpush.bf16.msra.mxu0 %v756
        %778 = vmatpush.bf16.msra.mxu0 %v755
        %779 = vmatmul.bf16.gmra.mxu0 %v654
        %v780 = vpop.f32.mrf.mxu0
        %v781 = vadd.f32 %v722, %v780
        %v782 = vpop.f32.mrf.mxu0
        %v783 = vadd.f32 %v722, %v782
        %784 = vdwg.mxu0
        %v785 = vperm.slane %v648, 1
        %v802 = vunpack.c.l.b16 %v674
        %v803 = vunpack.c.l.b16 %v675
        %v804 = vunpack.c.l.b16 %v676
        %v805 = vunpack.c.l.b16 %v677
        %v806 = vunpack.c.l.b16 %v678
        %v807 = vunpack.c.l.b16 %v679
        %v808 = vunpack.c.l.b16 %v680
        %v809 = vunpack.c.l.b16 %v681
        %v810 = vunpack.c.l.b16 %v682
        %v811 = vunpack.c.l.b16 %v683
        %v812 = vunpack.c.l.b16 %v684
        %v813 = vunpack.c.l.b16 %v685
        %v814 = vunpack.c.l.b16 %v686
        %v815 = vunpack.c.l.b16 %v687
        %v816 = vunpack.c.l.b16 %v688
        %v817 = vunpack.c.l.b16 %v689
        %v818 = vpack.c.b16 %v803, %v802
        %v819 = vpack.c.b16 %v805, %v804
        %v820 = vpack.c.b16 %v807, %v806
        %v821 = vpack.c.b16 %v809, %v808
        %v822 = vpack.c.b16 %v811, %v810
        %v823 = vpack.c.b16 %v813, %v812
        %v824 = vpack.c.b16 %v815, %v814
        %v825 = vpack.c.b16 %v817, %v816
        %834 = vmatpush.bf16.msra.mxu0 %v825
        %835 = vmatpush.bf16.msra.mxu0 %v824
        %836 = vmatpush.bf16.msra.mxu0 %v823
        %837 = vmatpush.bf16.msra.mxu0 %v822
        %838 = vmatpush.bf16.msra.mxu0 %v821
        %839 = vmatpush.bf16.msra.mxu0 %v820
        %840 = vmatpush.bf16.msra.mxu0 %v819
        %841 = vmatpush.bf16.msra.mxu0 %v818
        %842 = vmatmul.bf16.gmra.mxu0 %v655
        %v843 = vpop.f32.mrf.mxu0
        %v844 = vadd.f32 %v785, %v843
        %v845 = vpop.f32.mrf.mxu0
        %v846 = vadd.f32 %v785, %v845
        %847 = vdwg.mxu0
        %v848 = vperm.slane %v648, 2
        %v865 = vunpack.c.l.b16 %v690
        %v866 = vunpack.c.l.b16 %v691
        %v867 = vunpack.c.l.b16 %v692
        %v868 = vunpack.c.l.b16 %v693
        %v869 = vunpack.c.l.b16 %v694
        %v870 = vunpack.c.l.b16 %v695
        %v871 = vunpack.c.l.b16 %v696
        %v872 = vunpack.c.l.b16 %v697
        %v873 = vunpack.c.l.b16 %v698
        %v874 = vunpack.c.l.b16 %v699
        %v875 = vunpack.c.l.b16 %v700
        %v876 = vunpack.c.l.b16 %v701
        %v877 = vunpack.c.l.b16 %v702
        %v878 = vunpack.c.l.b16 %v703
        %v879 = vunpack.c.l.b16 %v704
        %v880 = vunpack.c.l.b16 %v705
        %v881 = vpack.c.b16 %v866, %v865
        %v882 = vpack.c.b16 %v868, %v867
        %v883 = vpack.c.b16 %v870, %v869
        %v884 = vpack.c.b16 %v872, %v871
        %v885 = vpack.c.b16 %v874, %v873
        %v886 = vpack.c.b16 %v876, %v875
        %v887 = vpack.c.b16 %v878, %v877
        %v888 = vpack.c.b16 %v880, %v879
        %897 = vmatpush.bf16.msra.mxu0 %v888
        %898 = vmatpush.bf16.msra.mxu0 %v887
        %899 = vmatpush.bf16.msra.mxu0 %v886
        %900 = vmatpush.bf16.msra.mxu0 %v885
        %901 = vmatpush.bf16.msra.mxu0 %v884
        %902 = vmatpush.bf16.msra.mxu0 %v883
        %903 = vmatpush.bf16.msra.mxu0 %v882
        %904 = vmatpush.bf16.msra.mxu0 %v881
        %905 = vmatmul.bf16.gmra.mxu0 %v657
        %v906 = vpop.f32.mrf.mxu0
        %v907 = vadd.f32 %v848, %v906
        %v908 = vpop.f32.mrf.mxu0
        %v909 = vadd.f32 %v848, %v908
        %910 = vdwg.mxu0
        %v911 = vpack.c.bf16 %v781, %v781
        %v912 = vpack.c.bf16 %v783, %v783
        %v913 = vpack.c.bf16 %v844, %v844
        %v914 = vpack.c.bf16 %v846, %v846
        %v915 = vpack.c.bf16 %v907, %v907
        %v916 = vpack.c.bf16 %v909, %v909
        %917 = vmatpush.bf16.xpose.msra.mxu0 0
        %918 = vmatpush.bf16.xpose.msra.mxu0 0
        %919 = vmatpush.bf16.xpose.msra.mxu0 0
        %920 = vmatpush.bf16.xpose.msra.mxu0 0
        %921 = vmatpush.bf16.xpose.msra.mxu0 0
        %922 = vmatpush.bf16.xpose.msra.mxu0 0
        %923 = vmatpush.bf16.xpose.msra.mxu0 0
        %924 = vmatpush.bf16.xpose.msra.mxu0 %v913
        %925 = vmatmul.bf16.gmra.mxu0 %v911
        %v926 = vpop.f32.mrf.mxu0
        %v927 = vadd.f32 0.0, %v926
        %v928 = vpop.f32.mrf.mxu0
        %929 = vdwg.mxu0
        %930 = vmatpush.bf16.xpose.msra.mxu0 0
        %931 = vmatpush.bf16.xpose.msra.mxu0 0
        %932 = vmatpush.bf16.xpose.msra.mxu0 0
        %933 = vmatpush.bf16.xpose.msra.mxu0 0
        %934 = vmatpush.bf16.xpose.msra.mxu0 0
        %935 = vmatpush.bf16.xpose.msra.mxu0 0
        %936 = vmatpush.bf16.xpose.msra.mxu0 0
        %937 = vmatpush.bf16.xpose.msra.mxu0 %v914
        %938 = vmatmul.bf16.gmra.mxu0 %v912
        %v939 = vpop.f32.mrf.mxu0
        %v940 = vadd.f32 0.0, %v939
        %v941 = vpop.f32.mrf.mxu0
        %942 = vdwg.mxu0
        %v943 = vmul.f32 %v927, 0.17677669
        %v944 = vmul.f32 %v940, 0.17677669
        %vm945 = vcmask 64512
        %v946 = vsel %vm945, %v943, -inf
        %947 = vmax.xlane.f32.xlu0 %v946
        %v948 = vpop.xlane.xlu0 %947
        %v949 = vsel %vm945, %v944, -inf
        %950 = vmax.xlane.f32.xlu0 %v949
        %v951 = vpop.xlane.xlu0 %950
        %v952 = vsub.f32 %v943, %v948
        %v953 = vsub.f32 %v944, %v951
        %v954 = vmul.f32 %v952, 1.442695
        %v955 = vpow.pop %v954
        %v956 = vmul.f32 %v953, 1.442695
        %v957 = vpow.pop %v956
        %v958 = vsel %vm945, %v955, 0.0
        %959 = vadd.xlane.f32.xlu0 %v958
        %v960 = vpop.xlane.xlu0 %959
        %v961 = vsel %vm945, %v957, 0.0
        %962 = vadd.xlane.f32.xlu0 %v961
        %v963 = vpop.xlane.xlu0 %962
        %v964 = vpack.c.bf16 %v955, %v955
        %v965 = vpack.c.bf16 %v957, %v957
        %v967 = vsel %vm945, %v964, 0
        %vm969 = vcmask 1043456
        %v971 = vsel %vm969, %v915, 0
        %973 = vmatpush.bf16.msra.mxu0 0
        %974 = vmatpush.bf16.msra.mxu0 0
        %975 = vmatpush.bf16.msra.mxu0 0
        %976 = vmatpush.bf16.msra.mxu0 0
        %977 = vmatpush.bf16.msra.mxu0 0
        %978 = vmatpush.bf16.msra.mxu0 0
        %979 = vmatpush.bf16.msra.mxu0 0
        %980 = vmatpush.bf16.msra.mxu0 %v971
        %981 = vmatmul.bf16.gmra.mxu0 %v967
        %v982 = vpop.f32.mrf.mxu0
        %v983 = vadd.f32 0.0, %v982
        %v984 = vpop.f32.mrf.mxu0
        %985 = vdwg.mxu0
        %v987 = vsel %vm945, %v965, 0
        %v990 = vsel %vm969, %v916, 0
        %992 = vmatpush.bf16.msra.mxu0 0
        %993 = vmatpush.bf16.msra.mxu0 0
        %994 = vmatpush.bf16.msra.mxu0 0
        %995 = vmatpush.bf16.msra.mxu0 0
        %996 = vmatpush.bf16.msra.mxu0 0
        %997 = vmatpush.bf16.msra.mxu0 0
        %998 = vmatpush.bf16.msra.mxu0 0
        %999 = vmatpush.bf16.msra.mxu0 %v990
        %1000 = vmatmul.bf16.gmra.mxu0 %v987
        %v1001 = vpop.f32.mrf.mxu0
        %v1002 = vadd.f32 0.0, %v1001
        %v1003 = vpop.f32.mrf.mxu0
        %1004 = vdwg.mxu0
        %v1005 = vrcp.pop %v960
        %v1006 = vrcp.pop %v963
        %v1007 = vmul.f32 %v983, %v1005
        %v1008 = vmul.f32 %v1002, %v1006
        %v1009 = vpack.c.bf16 %v1008, %v1007
        %v1010 = vperm.slane %v648, 3
        %v1027 = vunpack.c.l.b16 %v706
        %v1028 = vunpack.c.l.b16 %v707
        %v1029 = vunpack.c.l.b16 %v708
        %v1030 = vunpack.c.l.b16 %v709
        %v1031 = vunpack.c.l.b16 %v710
        %v1032 = vunpack.c.l.b16 %v711
        %v1033 = vunpack.c.l.b16 %v712
        %v1034 = vunpack.c.l.b16 %v713
        %v1035 = vunpack.c.l.b16 %v714
        %v1036 = vunpack.c.l.b16 %v715
        %v1037 = vunpack.c.l.b16 %v716
        %v1038 = vunpack.c.l.b16 %v717
        %v1039 = vunpack.c.l.b16 %v718
        %v1040 = vunpack.c.l.b16 %v719
        %v1041 = vunpack.c.l.b16 %v720
        %v1042 = vunpack.c.l.b16 %v721
        %v1043 = vpack.c.b16 %v1028, %v1027
        %v1044 = vpack.c.b16 %v1030, %v1029
        %v1045 = vpack.c.b16 %v1032, %v1031
        %v1046 = vpack.c.b16 %v1034, %v1033
        %v1047 = vpack.c.b16 %v1036, %v1035
        %v1048 = vpack.c.b16 %v1038, %v1037
        %v1049 = vpack.c.b16 %v1040, %v1039
        %v1050 = vpack.c.b16 %v1042, %v1041
        %1059 = vmatpush.bf16.msra.mxu0 %v1050
        %1060 = vmatpush.bf16.msra.mxu0 %v1049
        %1061 = vmatpush.bf16.msra.mxu0 %v1048
        %1062 = vmatpush.bf16.msra.mxu0 %v1047
        %1063 = vmatpush.bf16.msra.mxu0 %v1046
        %1064 = vmatpush.bf16.msra.mxu0 %v1045
        %1065 = vmatpush.bf16.msra.mxu0 %v1044
        %1066 = vmatpush.bf16.msra.mxu0 %v1043
        %1067 = vmatmul.bf16.gmra.mxu0 %v1009
        %v1068 = vpop.f32.mrf.mxu0
        %v1069 = vadd.f32 %v1010, %v1068
        %v1070 = vpop.f32.mrf.mxu0
        %v1071 = vadd.f32 %v1010, %v1070
        %1072 = vdwg.mxu0
        %v1073 = vld [vmem:[#allocation16] sm:$0xf]
        %v1074 = vld [vmem:[#allocation16 + $0x4] sm:$0xf]
        %v1075 = vld [vmem:[#allocation16 + $0x8] sm:$0xf]
        %v1076 = vld [vmem:[#allocation16 + $0xc] sm:$0xf]
        %v1077 = vld [vmem:[#allocation16 + $0x10] sm:$0xf]
        %v1078 = vld [vmem:[#allocation16 + $0x14] sm:$0xf]
        %v1079 = vld [vmem:[#allocation16 + $0x18] sm:$0xf]
        %v1080 = vld [vmem:[#allocation16 + $0x1c] sm:$0xf]
        %v1081 = vld [vmem:[#allocation16 + $0x20] sm:$0xf]
        %v1082 = vld [vmem:[#allocation16 + $0x24] sm:$0xf]
        %v1083 = vld [vmem:[#allocation16 + $0x28] sm:$0xf]
        %v1084 = vld [vmem:[#allocation16 + $0x2c] sm:$0xf]
        %v1085 = vld [vmem:[#allocation16 + $0x30] sm:$0xf]
        %v1086 = vld [vmem:[#allocation16 + $0x34] sm:$0xf]
        %v1087 = vld [vmem:[#allocation16 + $0x38] sm:$0xf]
        %v1088 = vld [vmem:[#allocation16 + $0x3c] sm:$0xf]
        %v1089 = vld [vmem:[#allocation17] sm:$0xf]
        %v1090 = vld [vmem:[#allocation17 + $0x4] sm:$0xf]
        %v1091 = vld [vmem:[#allocation17 + $0x8] sm:$0xf]
        %v1092 = vld [vmem:[#allocation17 + $0xc] sm:$0xf]
        %v1093 = vld [vmem:[#allocation17 + $0x10] sm:$0xf]
        %v1094 = vld [vmem:[#allocation17 + $0x14] sm:$0xf]
        %v1095 = vld [vmem:[#allocation17 + $0x18] sm:$0xf]
        %v1096 = vld [vmem:[#allocation17 + $0x1c] sm:$0xf]
        %v1097 = vld [vmem:[#allocation17 + $0x20] sm:$0xf]
        %v1098 = vld [vmem:[#allocation17 + $0x24] sm:$0xf]
        %v1099 = vld [vmem:[#allocation17 + $0x28] sm:$0xf]
        %v1100 = vld [vmem:[#allocation17 + $0x2c] sm:$0xf]
        %v1101 = vld [vmem:[#allocation17 + $0x30] sm:$0xf]
        %v1102 = vld [vmem:[#allocation17 + $0x34] sm:$0xf]
        %v1103 = vld [vmem:[#allocation17 + $0x38] sm:$0xf]
        %v1104 = vld [vmem:[#allocation17 + $0x3c] sm:$0xf]
        %v1105 = vld [vmem:[#allocation19] sm:$0xf]
        %v1106 = vld [vmem:[#allocation19 + $0x4] sm:$0xf]
        %v1107 = vld [vmem:[#allocation19 + $0x8] sm:$0xf]
        %v1108 = vld [vmem:[#allocation19 + $0xc] sm:$0xf]
        %v1109 = vld [vmem:[#allocation19 + $0x10] sm:$0xf]
        %v1110 = vld [vmem:[#allocation19 + $0x14] sm:$0xf]
        %v1111 = vld [vmem:[#allocation19 + $0x18] sm:$0xf]
        %v1112 = vld [vmem:[#allocation19 + $0x1c] sm:$0xf]
        %v1113 = vld [vmem:[#allocation19 + $0x20] sm:$0xf]
        %v1114 = vld [vmem:[#allocation19 + $0x24] sm:$0xf]
        %v1115 = vld [vmem:[#allocation19 + $0x28] sm:$0xf]
        %v1116 = vld [vmem:[#allocation19 + $0x2c] sm:$0xf]
        %v1117 = vld [vmem:[#allocation19 + $0x30] sm:$0xf]
        %v1118 = vld [vmem:[#allocation19 + $0x34] sm:$0xf]
        %v1119 = vld [vmem:[#allocation19 + $0x38] sm:$0xf]
        %v1120 = vld [vmem:[#allocation19 + $0x3c] sm:$0xf]
        %v1121 = vld [vmem:[#allocation20] sm:$0xf]
        %v1122 = vld [vmem:[#allocation20 + $0x4] sm:$0xf]
        %v1123 = vld [vmem:[#allocation20 + $0x8] sm:$0xf]
        %v1124 = vld [vmem:[#allocation20 + $0xc] sm:$0xf]
        %v1125 = vld [vmem:[#allocation20 + $0x10] sm:$0xf]
        %v1126 = vld [vmem:[#allocation20 + $0x14] sm:$0xf]
        %v1127 = vld [vmem:[#allocation20 + $0x18] sm:$0xf]
        %v1128 = vld [vmem:[#allocation20 + $0x1c] sm:$0xf]
        %v1129 = vld [vmem:[#allocation20 + $0x20] sm:$0xf]
        %v1130 = vld [vmem:[#allocation20 + $0x24] sm:$0xf]
        %v1131 = vld [vmem:[#allocation20 + $0x28] sm:$0xf]
        %v1132 = vld [vmem:[#allocation20 + $0x2c] sm:$0xf]
        %v1133 = vld [vmem:[#allocation20 + $0x30] sm:$0xf]
        %v1134 = vld [vmem:[#allocation20 + $0x34] sm:$0xf]
        %v1135 = vld [vmem:[#allocation20 + $0x38] sm:$0xf]
        %v1136 = vld [vmem:[#allocation20 + $0x3c] sm:$0xf]
        %v1137 = vperm.slane %v648, 6
        %v1154 = vunpack.c.l.b16 %v1073
        %v1155 = vunpack.c.l.b16 %v1074
        %v1156 = vunpack.c.l.b16 %v1075
        %v1157 = vunpack.c.l.b16 %v1076
        %v1158 = vunpack.c.l.b16 %v1077
        %v1159 = vunpack.c.l.b16 %v1078
        %v1160 = vunpack.c.l.b16 %v1079
        %v1161 = vunpack.c.l.b16 %v1080
        %v1162 = vunpack.c.l.b16 %v1081
        %v1163 = vunpack.c.l.b16 %v1082
        %v1164 = vunpack.c.l.b16 %v1083
        %v1165 = vunpack.c.l.b16 %v1084
        %v1166 = vunpack.c.l.b16 %v1085
        %v1167 = vunpack.c.l.b16 %v1086
        %v1168 = vunpack.c.l.b16 %v1087
        %v1169 = vunpack.c.l.b16 %v1088
        %v1170 = vpack.c.b16 %v1155, %v1154
        %v1171 = vpack.c.b16 %v1157, %v1156
        %v1172 = vpack.c.b16 %v1159, %v1158
        %v1173 = vpack.c.b16 %v1161, %v1160
        %v1174 = vpack.c.b16 %v1163, %v1162
        %v1175 = vpack.c.b16 %v1165, %v1164
        %v1176 = vpack.c.b16 %v1167, %v1166
        %v1177 = vpack.c.b16 %v1169, %v1168
        %1186 = vmatpush.bf16.msra.mxu0 %v1177
        %1187 = vmatpush.bf16.msra.mxu0 %v1176
        %1188 = vmatpush.bf16.msra.mxu0 %v1175
        %1189 = vmatpush.bf16.msra.mxu0 %v1174
        %1190 = vmatpush.bf16.msra.mxu0 %v1173
        %1191 = vmatpush.bf16.msra.mxu0 %v1172
        %1192 = vmatpush.bf16.msra.mxu0 %v1171
        %1193 = vmatpush.bf16.msra.mxu0 %v1170
        %1194 = vmatmul.bf16.gmra.mxu0 %v655
        %v1195 = vpop.f32.mrf.mxu0
        %v1196 = vadd.f32 %v1137, %v1195
        %v1197 = vpop.f32.mrf.mxu0
        %v1198 = vadd.f32 %v1137, %v1197
        %1199 = vdwg.mxu0
        %v1200 = vperm.slane %v648, 7
        %v1217 = vunpack.c.l.b16 %v1089
        %v1218 = vunpack.c.l.b16 %v1090
        %v1219 = vunpack.c.l.b16 %v1091
        %v1220 = vunpack.c.l.b16 %v1092
        %v1221 = vunpack.c.l.b16 %v1093
        %v1222 = vunpack.c.l.b16 %v1094
        %v1223 = vunpack.c.l.b16 %v1095
        %v1224 = vunpack.c.l.b16 %v1096
        %v1225 = vunpack.c.l.b16 %v1097
        %v1226 = vunpack.c.l.b16 %v1098
        %v1227 = vunpack.c.l.b16 %v1099
        %v1228 = vunpack.c.l.b16 %v1100
        %v1229 = vunpack.c.l.b16 %v1101
        %v1230 = vunpack.c.l.b16 %v1102
        %v1231 = vunpack.c.l.b16 %v1103
        %v1232 = vunpack.c.l.b16 %v1104
        %v1233 = vpack.c.b16 %v1218, %v1217
        %v1234 = vpack.c.b16 %v1220, %v1219
        %v1235 = vpack.c.b16 %v1222, %v1221
        %v1236 = vpack.c.b16 %v1224, %v1223
        %v1237 = vpack.c.b16 %v1226, %v1225
        %v1238 = vpack.c.b16 %v1228, %v1227
        %v1239 = vpack.c.b16 %v1230, %v1229
        %v1240 = vpack.c.b16 %v1232, %v1231
        %1249 = vmatpush.bf16.msra.mxu0 %v1240
        %1250 = vmatpush.bf16.msra.mxu0 %v1239
        %1251 = vmatpush.bf16.msra.mxu0 %v1238
        %1252 = vmatpush.bf16.msra.mxu0 %v1237
        %1253 = vmatpush.bf16.msra.mxu0 %v1236
        %1254 = vmatpush.bf16.msra.mxu0 %v1235
        %1255 = vmatpush.bf16.msra.mxu0 %v1234
        %1256 = vmatpush.bf16.msra.mxu0 %v1233
        %1257 = vmatmul.bf16.gmra.mxu0 %v654
        %v1258 = vpop.f32.mrf.mxu0
        %v1259 = vadd.f32 %v1200, %v1258
        %v1260 = vpop.f32.mrf.mxu0
        %v1261 = vadd.f32 %v1200, %v1260
        %1262 = vdwg.mxu0
        %v1263 = vperm.slane %v649, 0
        %v1280 = vunpack.c.l.b16 %v1105
        %v1281 = vunpack.c.l.b16 %v1106
        %v1282 = vunpack.c.l.b16 %v1107
        %v1283 = vunpack.c.l.b16 %v1108
        %v1284 = vunpack.c.l.b16 %v1109
        %v1285 = vunpack.c.l.b16 %v1110
        %v1286 = vunpack.c.l.b16 %v1111
        %v1287 = vunpack.c.l.b16 %v1112
        %v1288 = vunpack.c.l.b16 %v1113
        %v1289 = vunpack.c.l.b16 %v1114
        %v1290 = vunpack.c.l.b16 %v1115
        %v1291 = vunpack.c.l.b16 %v1116
        %v1292 = vunpack.c.l.b16 %v1117
        %v1293 = vunpack.c.l.b16 %v1118
        %v1294 = vunpack.c.l.b16 %v1119
        %v1295 = vunpack.c.l.b16 %v1120
        %v1296 = vpack.c.b16 %v1281, %v1280
        %v1297 = vpack.c.b16 %v1283, %v1282
        %v1298 = vpack.c.b16 %v1285, %v1284
        %v1299 = vpack.c.b16 %v1287, %v1286
        %v1300 = vpack.c.b16 %v1289, %v1288
        %v1301 = vpack.c.b16 %v1291, %v1290
        %v1302 = vpack.c.b16 %v1293, %v1292
        %v1303 = vpack.c.b16 %v1295, %v1294
        %1312 = vmatpush.bf16.msra.mxu0 %v1303
        %1313 = vmatpush.bf16.msra.mxu0 %v1302
        %1314 = vmatpush.bf16.msra.mxu0 %v1301
        %1315 = vmatpush.bf16.msra.mxu0 %v1300
        %1316 = vmatpush.bf16.msra.mxu0 %v1299
        %1317 = vmatpush.bf16.msra.mxu0 %v1298
        %1318 = vmatpush.bf16.msra.mxu0 %v1297
        %1319 = vmatpush.bf16.msra.mxu0 %v1296
        %1320 = vmatmul.bf16.gmra.mxu0 %v656
        %v1321 = vpop.f32.mrf.mxu0
        %v1322 = vadd.f32 %v1263, %v1321
        %v1323 = vpop.f32.mrf.mxu0
        %v1324 = vadd.f32 %v1263, %v1323
        %1325 = vdwg.mxu0
        %v1326 = vpack.c.bf16 %v1196, %v1196
        %v1327 = vpack.c.bf16 %v1198, %v1198
        %v1328 = vpack.c.bf16 %v1259, %v1259
        %v1329 = vpack.c.bf16 %v1261, %v1261
        %v1330 = vpack.c.bf16 %v1322, %v1322
        %v1331 = vpack.c.bf16 %v1324, %v1324
        %1332 = vmatpush.bf16.xpose.msra.mxu0 0
        %1333 = vmatpush.bf16.xpose.msra.mxu0 0
        %1334 = vmatpush.bf16.xpose.msra.mxu0 0
        %1335 = vmatpush.bf16.xpose.msra.mxu0 0
        %1336 = vmatpush.bf16.xpose.msra.mxu0 0
        %1337 = vmatpush.bf16.xpose.msra.mxu0 0
        %1338 = vmatpush.bf16.xpose.msra.mxu0 0
        %1339 = vmatpush.bf16.xpose.msra.mxu0 %v1328
        %1340 = vmatmul.bf16.gmra.mxu0 %v1326
        %v1341 = vpop.f32.mrf.mxu0
        %v1342 = vadd.f32 0.0, %v1341
        %v1343 = vpop.f32.mrf.mxu0
        %1344 = vdwg.mxu0
        %1345 = vmatpush.bf16.xpose.msra.mxu0 0
        %1346 = vmatpush.bf16.xpose.msra.mxu0 0
        %1347 = vmatpush.bf16.xpose.msra.mxu0 0
        %1348 = vmatpush.bf16.xpose.msra.mxu0 0
        %1349 = vmatpush.bf16.xpose.msra.mxu0 0
        %1350 = vmatpush.bf16.xpose.msra.mxu0 0
        %1351 = vmatpush.bf16.xpose.msra.mxu0 0
        %1352 = vmatpush.bf16.xpose.msra.mxu0 %v1329
        %1353 = vmatmul.bf16.gmra.mxu0 %v1327
        %v1354 = vpop.f32.mrf.mxu0
        %v1355 = vadd.f32 0.0, %v1354
        %v1356 = vpop.f32.mrf.mxu0
        %1357 = vdwg.mxu0
        %v1358 = vmul.f32 %v1342, 0.17677669
        %v1359 = vmul.f32 %v1355, 0.17677669
        %v1360 = vsel %vm945, %v1358, -inf
        %1361 = vmax.xlane.f32.xlu0 %v1360
        %v1362 = vpop.xlane.xlu0 %1361
        %v1363 = vsel %vm945, %v1359, -inf
        %1364 = vmax.xlane.f32.xlu0 %v1363
        %v1365 = vpop.xlane.xlu0 %1364
        %v1366 = vsub.f32 %v1358, %v1362
        %v1367 = vsub.f32 %v1359, %v1365
        %v1368 = vmul.f32 %v1366, 1.442695
        %v1369 = vpow.pop %v1368
        %v1370 = vmul.f32 %v1367, 1.442695
        %v1371 = vpow.pop %v1370
        %v1372 = vsel %vm945, %v1369, 0.0
        %1373 = vadd.xlane.f32.xlu0 %v1372
        %v1374 = vpop.xlane.xlu0 %1373
        %v1375 = vsel %vm945, %v1371, 0.0
        %1376 = vadd.xlane.f32.xlu0 %v1375
        %v1377 = vpop.xlane.xlu0 %1376
        %v1378 = vpack.c.bf16 %v1369, %v1369
        %v1379 = vpack.c.bf16 %v1371, %v1371
        %v1381 = vsel %vm945, %v1378, 0
        %v1384 = vsel %vm969, %v1330, 0
        %1386 = vmatpush.bf16.msra.mxu0 0
        %1387 = vmatpush.bf16.msra.mxu0 0
        %1388 = vmatpush.bf16.msra.mxu0 0
        %1389 = vmatpush.bf16.msra.mxu0 0
        %1390 = vmatpush.bf16.msra.mxu0 0
        %1391 = vmatpush.bf16.msra.mxu0 0
        %1392 = vmatpush.bf16.msra.mxu0 0
        %1393 = vmatpush.bf16.msra.mxu0 %v1384
        %1394 = vmatmul.bf16.gmra.mxu0 %v1381
        %v1395 = vpop.f32.mrf.mxu0
        %v1396 = vadd.f32 0.0, %v1395
        %v1397 = vpop.f32.mrf.mxu0
        %1398 = vdwg.mxu0
        %v1400 = vsel %vm945, %v1379, 0
        %v1403 = vsel %vm969, %v1331, 0
        %1405 = vmatpush.bf16.msra.mxu0 0
        %1406 = vmatpush.bf16.msra.mxu0 0
        %1407 = vmatpush.bf16.msra.mxu0 0
        %1408 = vmatpush.bf16.msra.mxu0 0
        %1409 = vmatpush.bf16.msra.mxu0 0
        %1410 = vmatpush.bf16.msra.mxu0 0
        %1411 = vmatpush.bf16.msra.mxu0 0
        %1412 = vmatpush.bf16.msra.mxu0 %v1403
        %1413 = vmatmul.bf16.gmra.mxu0 %v1400
        %v1414 = vpop.f32.mrf.mxu0
        %v1415 = vadd.f32 0.0, %v1414
        %v1416 = vpop.f32.mrf.mxu0
        %1417 = vdwg.mxu0
        %v1418 = vrcp.pop %v1374
        %v1419 = vrcp.pop %v1377
        %v1420 = vmul.f32 %v1396, %v1418
        %v1421 = vmul.f32 %v1415, %v1419
        %v1422 = vpack.c.bf16 %v1421, %v1420
        %v1423 = vperm.slane %v649, 1
        %v1440 = vunpack.c.l.b16 %v1121
        %v1441 = vunpack.c.l.b16 %v1122
        %v1442 = vunpack.c.l.b16 %v1123
        %v1443 = vunpack.c.l.b16 %v1124
        %v1444 = vunpack.c.l.b16 %v1125
        %v1445 = vunpack.c.l.b16 %v1126
        %v1446 = vunpack.c.l.b16 %v1127
        %v1447 = vunpack.c.l.b16 %v1128
        %v1448 = vunpack.c.l.b16 %v1129
        %v1449 = vunpack.c.l.b16 %v1130
        %v1450 = vunpack.c.l.b16 %v1131
        %v1451 = vunpack.c.l.b16 %v1132
        %v1452 = vunpack.c.l.b16 %v1133
        %v1453 = vunpack.c.l.b16 %v1134
        %v1454 = vunpack.c.l.b16 %v1135
        %v1455 = vunpack.c.l.b16 %v1136
        %v1456 = vpack.c.b16 %v1441, %v1440
        %v1457 = vpack.c.b16 %v1443, %v1442
        %v1458 = vpack.c.b16 %v1445, %v1444
        %v1459 = vpack.c.b16 %v1447, %v1446
        %v1460 = vpack.c.b16 %v1449, %v1448
        %v1461 = vpack.c.b16 %v1451, %v1450
        %v1462 = vpack.c.b16 %v1453, %v1452
        %v1463 = vpack.c.b16 %v1455, %v1454
        %1472 = vmatpush.bf16.msra.mxu0 %v1463
        %1473 = vmatpush.bf16.msra.mxu0 %v1462
        %1474 = vmatpush.bf16.msra.mxu0 %v1461
        %1475 = vmatpush.bf16.msra.mxu0 %v1460
        %1476 = vmatpush.bf16.msra.mxu0 %v1459
        %1477 = vmatpush.bf16.msra.mxu0 %v1458
        %1478 = vmatpush.bf16.msra.mxu0 %v1457
        %1479 = vmatpush.bf16.msra.mxu0 %v1456
        %1480 = vmatmul.bf16.gmra.mxu0 %v1422
        %v1481 = vpop.f32.mrf.mxu0
        %v1482 = vadd.f32 %v1423, %v1481
        %v1483 = vpop.f32.mrf.mxu0
        %v1484 = vadd.f32 %v1423, %v1483
        %1485 = vdwg.mxu0
        %v1486 = vadd.f32 %v643, %v1069
        %v1487 = vadd.f32 %v644, %v1071
        %1488 = vadd.xlane.f32.xlu0 %v1486
        %v1489 = vpop.xlane.xlu0 %1488
        %1490 = vadd.xlane.f32.xlu0 %v1487
        %v1491 = vpop.xlane.xlu0 %1490
        %v1492 = vrcp.pop 32.0
        %v1493 = vmul.f32 32.0, %v1492
        %v1494 = vsub.f32 1.0, %v1493
        %v1495 = vmul.f32 %v1492, %v1494
        %v1496 = vadd.f32 %v1492, %v1495
        %vm1497 = vweird.f32 %v1492
        %v1498 = vsel %vm1497, %v1492, %v1496
        %v1499 = vmul.f32 %v1489, %v1498
        %v1500 = vmul.f32 %v1491, %v1498
        %v1501 = vmul.f32 %v1486, %v1486
        %v1502 = vmul.f32 %v1487, %v1487
        %1503 = vadd.xlane.f32.xlu0 %v1501
        %v1504 = vpop.xlane.xlu0 %1503
        %1505 = vadd.xlane.f32.xlu0 %v1502
        %v1506 = vpop.xlane.xlu0 %1505
        %v1507 = vmul.f32 %v1504, %v1498
        %v1508 = vmul.f32 %v1506, %v1498
        %v1509 = vmul.f32 %v1499, %v1499
        %v1510 = vmul.f32 %v1500, %v1500
        %v1511 = vsub.f32 %v1507, %v1509
        %v1512 = vsub.f32 %v1508, %v1510
        %v1513 = vsub.f32 %v1486, %v1499
        %v1514 = vsub.f32 %v1487, %v1500
        %v1515 = vadd.f32 %v1511, 1e-05
        %v1516 = vadd.f32 %v1512, 1e-05
        %v1517 = vrsqrt.pop %v1515
        %v1518 = vmul.f32 %v1517, %v1515
        %v1519 = vmul.f32 %v1518, %v1517
        %v1520 = vmul.f32 0.5, %v1519
        %v1521 = vsub.f32 1.5, %v1520
        %v1522 = vmul.f32 %v1517, %v1521
        %vm1523 = vweird.f32 %v1515
        %vm1524 = vweird.f32 %v1517
        %vm1525 = vmor %vm1523, %vm1524
        %v1526 = vsel %vm1525, %v1517, %v1522
        %v1527 = vrsqrt.pop %v1516
        %v1528 = vmul.f32 %v1527, %v1516
        %v1529 = vmul.f32 %v1528, %v1527
        %v1530 = vmul.f32 0.5, %v1529
        %v1531 = vsub.f32 1.5, %v1530
        %v1532 = vmul.f32 %v1527, %v1531
        %vm1533 = vweird.f32 %v1516
        %vm1534 = vweird.f32 %v1527
        %vm1535 = vmor %vm1533, %vm1534
        %v1536 = vsel %vm1535, %v1527, %v1532
        %v1537 = vmul.f32 %v1513, %v1526
        %v1538 = vmul.f32 %v1514, %v1536
        %v1539 = vperm.slane %v648, 4
        %v1540 = vmul.f32 %v1537, %v1539
        %v1541 = vmul.f32 %v1538, %v1539
        %v1542 = vperm.slane %v648, 5
        %v1543 = vadd.f32 %v1540, %v1542
        %v1544 = vadd.f32 %v1541, %v1542
        %v1545 = vadd.f32 %v645, %v1482
        %v1546 = vadd.f32 %v646, %v1484
        %1547 = vadd.xlane.f32.xlu0 %v1545
        %v1548 = vpop.xlane.xlu0 %1547
        %1549 = vadd.xlane.f32.xlu0 %v1546
        %v1550 = vpop.xlane.xlu0 %1549
        %v1551 = vmul.f32 %v1548, %v1498
        %v1552 = vmul.f32 %v1550, %v1498
        %v1553 = vmul.f32 %v1545, %v1545
        %v1554 = vmul.f32 %v1546, %v1546
        %1555 = vadd.xlane.f32.xlu0 %v1553
        %v1556 = vpop.xlane.xlu0 %1555
        %1557 = vadd.xlane.f32.xlu0 %v1554
        %v1558 = vpop.xlane.xlu0 %1557
        %v1559 = vmul.f32 %v1556, %v1498
        %v1560 = vmul.f32 %v1558, %v1498
        %v1561 = vmul.f32 %v1551, %v1551
        %v1562 = vmul.f32 %v1552, %v1552
        %v1563 = vsub.f32 %v1559, %v1561
        %v1564 = vsub.f32 %v1560, %v1562
        %v1565 = vsub.f32 %v1545, %v1551
        %v1566 = vsub.f32 %v1546, %v1552
        %v1567 = vadd.f32 %v1563, 1e-05
        %v1568 = vadd.f32 %v1564, 1e-05
        %v1569 = vrsqrt.pop %v1567
        %v1570 = vmul.f32 %v1569, %v1567
        %v1571 = vmul.f32 %v1570, %v1569
        %v1572 = vmul.f32 0.5, %v1571
        %v1573 = vsub.f32 1.5, %v1572
        %v1574 = vmul.f32 %v1569, %v1573
        %vm1575 = vweird.f32 %v1567
        %vm1576 = vweird.f32 %v1569
        %vm1577 = vmor %vm1575, %vm1576
        %v1578 = vsel %vm1577, %v1569, %v1574
        %v1579 = vrsqrt.pop %v1568
        %v1580 = vmul.f32 %v1579, %v1568
        %v1581 = vmul.f32 %v1580, %v1579
        %v1582 = vmul.f32 0.5, %v1581
        %v1583 = vsub.f32 1.5, %v1582
        %v1584 = vmul.f32 %v1579, %v1583
        %vm1585 = vweird.f32 %v1568
        %vm1586 = vweird.f32 %v1579
        %vm1587 = vmor %vm1585, %vm1586
        %v1588 = vsel %vm1587, %v1579, %v1584
        %v1589 = vmul.f32 %v1565, %v1578
        %v1590 = vmul.f32 %v1566, %v1588
        %v1591 = vperm.slane %v649, 2
        %v1592 = vmul.f32 %v1589, %v1591
        %v1593 = vmul.f32 %v1590, %v1591
        %v1594 = vperm.slane %v649, 3
        %v1595 = vadd.f32 %v1592, %v1594
        %v1596 = vadd.f32 %v1593, %v1594
        %v1597 = vadd.f32 %v1543, %v1595
        %v1598 = vadd.f32 %v1544, %v1596
        %1599 = vadd.xlane.f32.xlu0 %v1597
        %v1600 = vpop.xlane.xlu0 %1599
        %1601 = vadd.xlane.f32.xlu0 %v1598
        %v1602 = vpop.xlane.xlu0 %1601
        %v1603 = vmul.f32 %v1600, %v1498
        %v1604 = vmul.f32 %v1602, %v1498
        %v1605 = vmul.f32 %v1597, %v1597
        %v1606 = vmul.f32 %v1598, %v1598
        %1607 = vadd.xlane.f32.xlu0 %v1605
        %v1608 = vpop.xlane.xlu0 %1607
        %1609 = vadd.xlane.f32.xlu0 %v1606
        %v1610 = vpop.xlane.xlu0 %1609
        %v1611 = vmul.f32 %v1608, %v1498
        %v1612 = vmul.f32 %v1610, %v1498
        %v1613 = vmul.f32 %v1603, %v1603
        %v1614 = vmul.f32 %v1604, %v1604
        %v1615 = vsub.f32 %v1611, %v1613
        %v1616 = vsub.f32 %v1612, %v1614
        %v1617 = vsub.f32 %v1597, %v1603
        %v1618 = vsub.f32 %v1598, %v1604
        %v1619 = vadd.f32 %v1615, 1e-05
        %v1620 = vadd.f32 %v1616, 1e-05
        %v1621 = vrsqrt.pop %v1619
        %v1622 = vmul.f32 %v1621, %v1619
        %v1623 = vmul.f32 %v1622, %v1621
        %v1624 = vmul.f32 0.5, %v1623
        %v1625 = vsub.f32 1.5, %v1624
        %v1626 = vmul.f32 %v1621, %v1625
        %vm1627 = vweird.f32 %v1619
        %vm1628 = vweird.f32 %v1621
        %vm1629 = vmor %vm1627, %vm1628
        %v1630 = vsel %vm1629, %v1621, %v1626
        %v1631 = vrsqrt.pop %v1620
        %v1632 = vmul.f32 %v1631, %v1620
        %v1633 = vmul.f32 %v1632, %v1631
        %v1634 = vmul.f32 0.5, %v1633
        %v1635 = vsub.f32 1.5, %v1634
        %v1636 = vmul.f32 %v1631, %v1635
        %vm1637 = vweird.f32 %v1620
        %vm1638 = vweird.f32 %v1631
        %vm1639 = vmor %vm1637, %vm1638
        %v1640 = vsel %vm1639, %v1631, %v1636
        %v1641 = vmul.f32 %v1617, %v1630
        %v1642 = vmul.f32 %v1618, %v1640
        %v1643 = vperm.slane %v649, 4
        %v1644 = vmul.f32 %v1641, %v1643
        %v1645 = vmul.f32 %v1642, %v1643
        %v1646 = vperm.slane %v649, 5
        %v1647 = vadd.f32 %v1644, %v1646
        %v1648 = vadd.f32 %v1645, %v1646
        %1649 = vst [vmem:[%s638] sm:$0xff] %v1647
        %1650 = vst [vmem:[%s638 + $0x8] sm:$0xff] %v1648
        %s1651 = sand.u32 %s307, 1
        %s1652 = scalar_lea.sflag [#allocation4], %s1651
        %s1653 = sand.u32 %s307, 1
        %s1654 = smul.addr %s1653, 16
        %s1655 = scalar_lea.vmem [#allocation22], %s1654
        // Predicated region
        $region117: #{tpu_custom_call.1} parent=67 // pred_check
          %p1656 = pneg %p317
        $region118: #{tpu_custom_call.1} parent=67 // pred_check_branch
          %1658 = sbr.rel (%p1656) target = $region120
        $region119: #{tpu_custom_call.1} parent=67 // pred_region
          %s1659 = smul.u32 2, %s37
          %1661 = vsyncadd %s1652, 0
          %s1662 = smul.addr %s1659, 8
          %s1663 = scalar_lea.hbm %s12, %s1662
          %s1664 = sshll.u32 %s1655, 4
          %s1665 = int_to_ptr.vmem [resolvable:$true] %s1664
          %s1666 = sshll.u32 %s1663, 4
          %s1667 = int_to_ptr.hbm [resolvable:$true] %s1666
          %1672 = dma.vmem_to_hbm [thread:$0]  %s1665, 256, %s1667, %s1652, 128, 128, 8
        $region120: #{tpu_custom_call.1} parent=67 // pred_fallthru
          _
      $region68: #{tpu_custom_call.1} parent=5 // pred_fallthru
        _
      %p1673 = scmp.le.s32.totalorder 2, %s32
      // Predicated region
      $region121: #{tpu_custom_call.1} parent=5 // pred_check
        %p1674 = pneg %p1673
      $region122: #{tpu_custom_call.1} parent=5 // pred_check_branch
        %1676 = sbr.rel (%p1674) target = $region124
      $region123: #{tpu_custom_call.1} parent=5 // pred_region
        %s1677 = ssub.s32 %s32, 2
        // Predicated region
        $region125: #{tpu_custom_call.1} parent=123 // pred_check
          %p1678 = pneg %p323
        $region126: #{tpu_custom_call.1} parent=123 // pred_check_branch
          %1680 = sbr.rel (%p1678) target = $region128
        $region127: #{tpu_custom_call.1} parent=123 // pred_region
          %s1681 = sand.u32 %s308, 1
          %s1682 = scalar_lea.sflag [#allocation4], %s1681
          %s1683 = sand.u32 %s308, 1
          %s1684 = smul.addr %s1683, 16
          %s1685 = scalar_lea.vmem [#allocation22], %s1684
          %1687 = dma.done %s1682, 256
        $region128: #{tpu_custom_call.1} parent=123 // pred_fallthru
          _
      $region124: #{tpu_custom_call.1} parent=5 // pred_fallthru
        _
    $region6: #{tpu_custom_call.1} parent=1 // loop_footer
      %s36 = sadd.s32 1, %s32
    $region7: #{tpu_custom_call.1} parent=1 // loop_footer_branch
      %31 = sbr.rel target = $region3
    $region8: #{tpu_custom_call.1} parent=1 // loop_exit
      _
    %1688 = vsyncpa [#allocation3], 1
    %s1689 = scalar_lea.sflag [#allocation3], 1
    %1690 = vsyncpa %s1689, 1
    %1691 = vsyncpa [#allocation6], 1
    %s1692 = scalar_lea.sflag [#allocation6], 1
    %1693 = vsyncpa %s1692, 1
    %1694 = vsyncpa [#allocation9], 1
    %1695 = vsyncpa [#allocation12], 1
    %1696 = vsyncpa [#allocation15], 1
    %1697 = vsyncpa [#allocation18], 1
    %1698 = vsyncpa [#allocation21], 1
    %1699 = vsyncpa [#allocation4], 1
    %s1700 = scalar_lea.sflag [#allocation4], 1
    %1701 = vsyncpa %s1700, 1

</llo_original>
